<compile_context>
chip_gen: v7x
topology: tpu7x:2x2x1
jax: 0.10.0
libtpu: 0.0.40
codegen_flags: <defaults>
</compile_context>

<pallas_src>
import functools
import math

import jax
import jax.numpy as jnp
from jax.experimental import pallas as pl
from jax.experimental.pallas import tpu as pltpu


_VMEM_LIMIT = 48 * 1024 * 1024          # above 16/32 MiB scoped defaults, safe on v5e/v6e/v7x
_COMPUTE_DTYPE = jnp.bfloat16           # activations/weights; accumulation stays f32
_LN_EPS = 1e-5


def _cparams(dimension_semantics):
    return pltpu.CompilerParams(dimension_semantics=dimension_semantics,
                                vmem_limit_bytes=_VMEM_LIMIT)


def _tile(dim, target, align):
    """Largest tile <= target that divides `dim` and is a multiple of `align`;
    falls back to the full dim (always a legal block shape)."""
    if dim <= target:
        return dim
    t = (target // align) * align
    while t >= align:
        if dim % t == 0:
            return t
        t -= align
    return dim


def _heads_per_block(num_heads, head_dim):
    """Smallest group of heads whose combined width is lane-dense (multiple of 128);
    otherwise process all heads together (block width == full hidden dim)."""
    for hpb in range(1, num_heads + 1):
        if num_heads % hpb == 0 and (hpb * head_dim) % 128 == 0:
            return hpb
    return num_heads


# ----------------------------- Pallas kernels -----------------------------

def _layernorm_f32(x, g, b):
    mu = jnp.mean(x, axis=-1, keepdims=True)
    var = jnp.mean(jnp.square(x - mu), axis=-1, keepdims=True)
    return (x - mu) * jax.lax.rsqrt(var + _LN_EPS) * g + b


def _ln_qkv_kernel(x_ref, g_ref, bln_ref,
                   wq_ref, wk_ref, wv_ref,
                   bq_ref, bk_ref, bv_ref,
                   q_ref, k_ref, v_ref):
    """LayerNorm(x) followed by the three QKV projections (shared x load / LN compute)."""
    xn = _layernorm_f32(x_ref[...].astype(jnp.float32), g_ref[...], bln_ref[...])
    xn = xn.astype(x_ref.dtype)                                   # bf16 into the MXU
    for w_ref, b_ref, o_ref in ((wq_ref, bq_ref, q_ref),
                                (wk_ref, bk_ref, k_ref),
                                (wv_ref, bv_ref, v_ref)):
        y = jnp.dot(xn, w_ref[...], preferred_element_type=jnp.float32)
        o_ref[...] = (y + b_ref[...].astype(jnp.float32)).astype(o_ref.dtype)


def _ln_matmul_gelu_kernel(x_ref, g_ref, bln_ref, w_ref, b_ref, o_ref):
    """LayerNorm(x) @ W + b followed by tanh-GELU (GPT-2 'gelu_new')."""
    xn = _layernorm_f32(x_ref[...].astype(jnp.float32), g_ref[...], bln_ref[...])
    xn = xn.astype(x_ref.dtype)
    y = jnp.dot(xn, w_ref[...], preferred_element_type=jnp.float32)
    y = y + b_ref[...].astype(jnp.float32)
    o_ref[...] = jax.nn.gelu(y, approximate=True).astype(o_ref.dtype)


def _matmul_resid_kernel(x_ref, w_ref, b_ref, res_ref, o_ref, acc_ref):
    """K-tiled x @ W with f32 accumulator; bias + residual fused into the finalize step."""
    @pl.when(pl.program_id(2) == 0)
    def _():
        acc_ref[...] = jnp.zeros_like(acc_ref)

    acc_ref[...] += jnp.dot(x_ref[...], w_ref[...], preferred_element_type=jnp.float32)

    @pl.when(pl.program_id(2) == pl.num_programs(2) - 1)
    def _():
        y = acc_ref[...] + b_ref[...].astype(jnp.float32) + res_ref[...].astype(jnp.float32)
        o_ref[...] = y.astype(o_ref.dtype)


def _matmul_resid_single_k_kernel(x_ref, w_ref, b_ref, res_ref, o_ref):
    """Single-K fast path: no scratch accumulator, no pl.when phases."""
    y = jnp.dot(x_ref[...], w_ref[...], preferred_element_type=jnp.float32)
    y = y + b_ref[...].astype(jnp.float32) + res_ref[...].astype(jnp.float32)
    o_ref[...] = y.astype(o_ref.dtype)


def _layernorm_kernel(x_ref, g_ref, b_ref, o_ref):
    x = x_ref[...].astype(jnp.float32)
    o_ref[...] = _layernorm_f32(x, g_ref[...], b_ref[...]).astype(o_ref.dtype)


def _attention_kernel(q_ref, k_ref, v_ref, bias_ref, o_ref, *,
                      heads_per_blk, head_dim, scale):
    """Causal masked softmax attention for one (batch, head-block) per grid step.

    q/k/v/o blocks are (1, S, heads_per_blk*head_dim): the block width is either a
    multiple of 128 (real GPT-2 sizes) or the full hidden dim (toy sizes), and the
    head outputs are concatenated so the output write is ONE unmasked full-block
    store rather than per-head masked partial stores.
    """
    s = q_ref.shape[1]
    row = jax.lax.broadcasted_iota(jnp.int32, (s, s), 0)
    col = jax.lax.broadcasted_iota(jnp.int32, (s, s), 1)
    causal = jnp.where(col <= row, 0.0, -1e9)                     # (S, S) f32
    mask = causal + bias_ref[0].astype(jnp.float32)               # + (1, S) padding bias

    # TODO(synk): for long sequences, replace the full SxS score materialization with a
    # flash-style online-softmax loop tiled over the KV axis (m/l/acc VMEM scratch).
    outs = []
    for hh in range(heads_per_blk):
        lo = hh * head_dim
        qh = q_ref[0, :, lo:lo + head_dim]                        # (S, Dh) bf16
        kh = k_ref[0, :, lo:lo + head_dim]
        vh = v_ref[0, :, lo:lo + head_dim]
        sc = jnp.einsum("sd,td->st", qh, kh,
                        preferred_element_type=jnp.float32) * scale
        sc = sc + mask
        sc = sc - jnp.max(sc, axis=-1, keepdims=True)
        p = jnp.exp(sc)
        p = p * pl.reciprocal(jnp.sum(p, axis=-1, keepdims=True), approx=True)
        oh = jnp.einsum("st,td->sd", p.astype(vh.dtype), vh,
                        preferred_element_type=jnp.float32)
        outs.append(oh)
    o_ref[0] = jnp.concatenate(outs, axis=-1).astype(o_ref.dtype)  # single lane-dense store


# ----------------------------- wrappers -----------------------------

def ln_qkv(x, g, bln, wq, wk, wv, bq, bk, bv):
    m, h = x.shape
    tm = _tile(m, 512, 8)
    tn = _tile(h, 512, 128)
    grid = (m // tm, h // tn)
    row_spec = pl.BlockSpec((1, h), lambda i, j: (0, 0))
    w_spec = pl.BlockSpec((h, tn), lambda i, j: (0, j))
    b_spec = pl.BlockSpec((1, tn), lambda i, j: (0, j))
    o_spec = pl.BlockSpec((tm, tn), lambda i, j: (i, j))
    return pl.pallas_call(
        _ln_qkv_kernel,
        out_shape=tuple(jax.ShapeDtypeStruct((m, h), x.dtype) for _ in range(3)),
        grid=grid,
        in_specs=[
            pl.BlockSpec((tm, h), lambda i, j: (i, 0)),
            row_spec, row_spec,
            w_spec, w_spec, w_spec,
            b_spec, b_spec, b_spec,
        ],
        out_specs=(o_spec, o_spec, o_spec),
        compiler_params=_cparams(("parallel", "parallel")),
    )(x, g.reshape(1, h), bln.reshape(1, h),
      wq, wk, wv,
      bq.reshape(1, h), bk.reshape(1, h), bv.reshape(1, h))


def ln_matmul_gelu(x, g, bln, w, b):
    m, h = x.shape
    n = w.shape[1]
    tm = _tile(m, 512, 8)
    tn = _tile(n, 512, 128)
    grid = (m // tm, n // tn)
    return pl.pallas_call(
        _ln_matmul_gelu_kernel,
        out_shape=jax.ShapeDtypeStruct((m, n), x.dtype),
        grid=grid,
        in_specs=[
            pl.BlockSpec((tm, h), lambda i, j: (i, 0)),
            pl.BlockSpec((1, h), lambda i, j: (0, 0)),
            pl.BlockSpec((1, h), lambda i, j: (0, 0)),
            pl.BlockSpec((h, tn), lambda i, j: (0, j)),
            pl.BlockSpec((1, tn), lambda i, j: (0, j)),
        ],
        out_specs=pl.BlockSpec((tm, tn), lambda i, j: (i, j)),
        compiler_params=_cparams(("parallel", "parallel")),
    )(x, g.reshape(1, h), bln.reshape(1, h), w, b.reshape(1, n))


def matmul_bias_residual(x, w, b, res):
    m, kdim = x.shape
    n = w.shape[1]
    tm = _tile(m, 512, 8)
    tn = _tile(n, 512, 128)
    tk = _tile(kdim, 512, 128)

    if kdim // tk == 1:
        # Whole contraction fits in one block: skip scratch accumulator + phase gating.
        return pl.pallas_call(
            _matmul_resid_single_k_kernel,
            out_shape=jax.ShapeDtypeStruct((m, n), res.dtype),
            grid=(m // tm, n // tn),
            in_specs=[
                pl.BlockSpec((tm, kdim), lambda i, j: (i, 0)),
                pl.BlockSpec((kdim, tn), lambda i, j: (0, j)),
                pl.BlockSpec((1, tn), lambda i, j: (0, j)),
                pl.BlockSpec((tm, tn), lambda i, j: (i, j)),
            ],
            out_specs=pl.BlockSpec((tm, tn), lambda i, j: (i, j)),
            compiler_params=_cparams(("parallel", "parallel")),
        )(x, w, b.reshape(1, n), res)

    grid = (m // tm, n // tn, kdim // tk)
    return pl.pallas_call(
        _matmul_resid_kernel,
        out_shape=jax.ShapeDtypeStruct((m, n), res.dtype),
        grid=grid,
        in_specs=[
            pl.BlockSpec((tm, tk), lambda i, j, kk: (i, kk)),
            pl.BlockSpec((tk, tn), lambda i, j, kk: (kk, j)),
            pl.BlockSpec((1, tn), lambda i, j, kk: (0, j)),
            pl.BlockSpec((tm, tn), lambda i, j, kk: (i, j)),
        ],
        out_specs=pl.BlockSpec((tm, tn), lambda i, j, kk: (i, j)),
        scratch_shapes=[pltpu.VMEM((tm, tn), jnp.float32)],
        compiler_params=_cparams(("parallel", "parallel", "arbitrary")),
    )(x, w, b.reshape(1, n), res)


def layernorm(x, g, b, out_dtype=None):
    m, h = x.shape
    out_dtype = x.dtype if out_dtype is None else out_dtype
    tm = _tile(m, 1024, 8)
    grid = (m // tm,)
    return pl.pallas_call(
        _layernorm_kernel,
        out_shape=jax.ShapeDtypeStruct((m, h), out_dtype),
        grid=grid,
        in_specs=[
            pl.BlockSpec((tm, h), lambda i: (i, 0)),
            pl.BlockSpec((1, h), lambda i: (0, 0)),
            pl.BlockSpec((1, h), lambda i: (0, 0)),
        ],
        out_specs=pl.BlockSpec((tm, h), lambda i: (i, 0)),
        compiler_params=_cparams(("parallel",)),
    )(x, g.reshape(1, h), b.reshape(1, h))


def attention(q, k, v, bias, num_heads):
    # q, k, v: (B, S, H) head-major within H;  bias: (B, 1, S) additive padding mask (f32)
    bsz, s, h = q.shape
    dh = h // num_heads
    hpb = _heads_per_block(num_heads, dh)
    blk = hpb * dh
    grid = (bsz, num_heads // hpb)
    kernel = functools.partial(_attention_kernel, heads_per_blk=hpb, head_dim=dh,
                               scale=1.0 / math.sqrt(dh))
    qkv_spec = pl.BlockSpec((1, s, blk), lambda bi, hi: (bi, 0, hi))
    return pl.pallas_call(
        kernel,
        out_shape=jax.ShapeDtypeStruct((bsz, s, h), q.dtype),
        grid=grid,
        in_specs=[qkv_spec, qkv_spec, qkv_spec,
                  pl.BlockSpec((1, 1, s), lambda bi, hi: (bi, 0, 0))],
        out_specs=qkv_spec,
        compiler_params=_cparams(("parallel", "parallel")),
    )(q, k, v, bias)


# ----------------------------- model -----------------------------

def init_params(key, vocab, max_pos, hidden, num_layers, param_dtype=_COMPUTE_DTYPE):
    keys = jax.random.split(key, 2 + num_layers)

    def dense(k, fan_in, fan_out):
        return (jax.random.normal(k, (fan_in, fan_out), jnp.float32) * 0.02).astype(param_dtype)

    params = {
        "wte": jax.random.normal(keys[0], (vocab, hidden), jnp.float32) * 0.02,
        "wpe": jax.random.normal(keys[1], (max_pos, hidden), jnp.float32) * 0.01,
        "lnf_g": jnp.ones((hidden,), jnp.float32),
        "lnf_b": jnp.zeros((hidden,), jnp.float32),
        "layers": [],
    }
    for l in range(num_layers):
        lk = jax.random.split(keys[2 + l], 6)
        params["layers"].append({
            "ln1_g": jnp.ones((hidden,), jnp.float32),
            "ln1_b": jnp.zeros((hidden,), jnp.float32),
            # GPT-2's fused c_attn split into its Q / K / V halves (same semantics).
            "w_q": dense(lk[0], hidden, hidden),
            "w_k": dense(lk[1], hidden, hidden),
            "w_v": dense(lk[2], hidden, hidden),
            "b_q": jnp.zeros((hidden,), jnp.float32),
            "b_k": jnp.zeros((hidden,), jnp.float32),
            "b_v": jnp.zeros((hidden,), jnp.float32),
            "w_attn_proj": dense(lk[3], hidden, hidden),
            "b_attn_proj": jnp.zeros((hidden,), jnp.float32),
            "ln2_g": jnp.ones((hidden,), jnp.float32),
            "ln2_b": jnp.zeros((hidden,), jnp.float32),
            "w_fc": dense(lk[4], hidden, 4 * hidden),
            "b_fc": jnp.zeros((4 * hidden,), jnp.float32),
            "w_mlp_proj": dense(lk[5], 4 * hidden, hidden),
            "b_mlp_proj": jnp.zeros((hidden,), jnp.float32),
        })
    return params


def gpt2_word_encoder_forward(params, input_ids, attention_mask, num_heads):
    """Returns last_hidden_state of shape (B, S, H), matching GPT2Model(**inputs)."""
    b, s = input_ids.shape
    h = params["wte"].shape[1]

    # Embedding lookup (glue, plain JAX gather), then drop to the bf16 compute dtype.
    pos = jnp.arange(s)
    x = (params["wte"][input_ids] + params["wpe"][pos][None, :, :]).astype(_COMPUTE_DTYPE)
    xf = x.reshape(b * s, h)

    # One additive padding bias per batch (not per head), kept in f32: (B, 1, S).
    bias = ((1.0 - attention_mask.astype(jnp.float32)) * -1e9).reshape(b, 1, s)

    for lyr in params["layers"]:
        # --- attention block: LN1 fused into QKV, residual fused into the projection ---
        q, k, v = ln_qkv(xf, lyr["ln1_g"], lyr["ln1_b"],
                         lyr["w_q"], lyr["w_k"], lyr["w_v"],
                         lyr["b_q"], lyr["b_k"], lyr["b_v"])            # each (B*S, H)
        a = attention(q.reshape(b, s, h), k.reshape(b, s, h), v.reshape(b, s, h),
                      bias, num_heads)                                   # (B, S, H)
        xf = matmul_bias_residual(a.reshape(b * s, h),
                                  lyr["w_attn_proj"], lyr["b_attn_proj"], xf)

        # --- MLP block: LN2 fused into FC+GELU, residual fused into the projection ---
        m = ln_matmul_gelu(xf, lyr["ln2_g"], lyr["ln2_b"], lyr["w_fc"], lyr["b_fc"])
        xf = matmul_bias_residual(m, lyr["w_mlp_proj"], lyr["b_mlp_proj"], xf)

    out = layernorm(xf, params["lnf_g"], params["lnf_b"], out_dtype=jnp.float32)
    return out.reshape(b, s, h)


# TODO(synk): pretrained-GPT2 weight loading / tokenizer resize from the original
# module has no in-script equivalent; weights here are deterministic synthetic inits.

if __name__ == "__main__":
    B, S, H, NH, LAYERS = 2, 8, 32, 2, 2
    VOCAB, MAX_POS = 100, 16

    key = jax.random.PRNGKey(0)
    k_param, k_ids = jax.random.split(key)

    params = init_params(k_param, VOCAB, MAX_POS, H, LAYERS)

    input_ids = jax.random.randint(k_ids, (B, S), 0, VOCAB, dtype=jnp.int32)
    attention_mask = jnp.ones((B, S), jnp.int32).at[1, 5:].set(0)   # pad tail of seq 1

    fwd = jax.jit(functools.partial(gpt2_word_encoder_forward, num_heads=NH))
    last_hidden_state = fwd(params, input_ids, attention_mask)
    jax.block_until_ready(last_hidden_state)

    assert last_hidden_state.shape == (B, S, H)
    assert last_hidden_state.dtype == jnp.float32
    assert bool(jnp.all(jnp.isfinite(last_hidden_state)))
    print("KERNEL_OK")
</pallas_src>

<mosaic_0001>
module attributes {stable_mosaic.version = 11 : i64} {
  func.func @_attention_kernel(%arg0: i32, %arg1: i32, %arg2: memref<1x8x32xbf16, #tpu.memory_space<vmem>>, %arg3: memref<1x8x32xbf16, #tpu.memory_space<vmem>>, %arg4: memref<1x8x32xbf16, #tpu.memory_space<vmem>>, %arg5: memref<1x1x8xf32, #tpu.memory_space<vmem>>, %arg6: memref<1x8x32xbf16, #tpu.memory_space<vmem>>) attributes {dimension_semantics = [#tpu.dimension_semantics<parallel>, #tpu.dimension_semantics<parallel>], iteration_bounds = array<i64: 2, 1>, scalar_prefetch = 0 : i64, scratch_operands = 0 : i64, tpu.core_type = #tpu.core_type<tc>, window_params = [{transform_indices = @transform_0, window_bounds = array<i64: 1, 8, 32>}, {transform_indices = @transform_1, window_bounds = array<i64: 1, 8, 32>}, {transform_indices = @transform_2, window_bounds = array<i64: 1, 8, 32>}, {transform_indices = @transform_3, window_bounds = array<i64: 1, 1, 8>}, {transform_indices = @transform_4, window_bounds = array<i64: 1, 8, 32>}]} {
    %0 = tpu.iota {dimensions = array<i32: 0>} : vector<8x8xi32>
    %1 = tpu.iota {dimensions = array<i32: 1>} : vector<8x8xi32>
    %2 = arith.cmpi sle, %1, %0 : vector<8x8xi32>
    %cst = arith.constant 0.000000e+00 : f32
    %cst_0 = arith.constant -1.000000e+09 : f32
    %3 = vector.broadcast %cst : f32 to vector<8x8xf32>
    %4 = vector.broadcast %cst_0 : f32 to vector<8x8xf32>
    %5 = arith.select %2, %3, %4 : vector<8x8xi1>, vector<8x8xf32>
    %c0 = arith.constant 0 : index
    %c0_1 = arith.constant 0 : index
    %c0_2 = arith.constant 0 : index
    %6 = vector.load %arg5[%c0, %c0_1, %c0_2] : memref<1x1x8xf32, #tpu.memory_space<vmem>>, vector<1x1x8xf32>
    %7 = vector.shape_cast %6 : vector<1x1x8xf32> to vector<1x8xf32>
    %8 = vector.broadcast %7 : vector<1x8xf32> to vector<8x8xf32>
    %9 = arith.addf %5, %8 : vector<8x8xf32>
    %c0_3 = arith.constant 0 : index
    %c0_4 = arith.constant 0 : index
    %c0_5 = arith.constant 0 : index
    %10 = vector.load %arg2[%c0_3, %c0_4, %c0_5] : memref<1x8x32xbf16, #tpu.memory_space<vmem>>, vector<1x8x16xbf16>
    %11 = vector.shape_cast %10 : vector<1x8x16xbf16> to vector<8x16xbf16>
    %c0_6 = arith.constant 0 : index
    %c0_7 = arith.constant 0 : index
    %c0_8 = arith.constant 0 : index
    %12 = vector.load %arg3[%c0_6, %c0_7, %c0_8] : memref<1x8x32xbf16, #tpu.memory_space<vmem>>, vector<1x8x16xbf16>
    %13 = vector.shape_cast %12 : vector<1x8x16xbf16> to vector<8x16xbf16>
    %c0_9 = arith.constant 0 : index
    %c0_10 = arith.constant 0 : index
    %c0_11 = arith.constant 0 : index
    %14 = vector.load %arg4[%c0_9, %c0_10, %c0_11] : memref<1x8x32xbf16, #tpu.memory_space<vmem>>, vector<1x8x16xbf16>
    %15 = vector.shape_cast %14 : vector<1x8x16xbf16> to vector<8x16xbf16>
    "tpu.trace_start"() <{level = 10 : i32, message = "sd,td->st"}> : () -> ()
    %cst_12 = arith.constant dense<0.000000e+00> : vector<8x8xf32>
    %16 = tpu.matmul %11, %13, %cst_12 {dimension_numbers = #tpu.dot_dimension_numbers<[1], [1], [0], [0], [0, 0, 1, 0], [], []>} : vector<8x16xbf16>, vector<8x16xbf16>, vector<8x8xf32> -> vector<8x8xf32>
    "tpu.trace_stop"() : () -> ()
    %cst_13 = arith.constant 2.500000e-01 : f32
    %17 = vector.broadcast %cst_13 : f32 to vector<8x8xf32>
    %18 = arith.mulf %16, %17 : vector<8x8xf32>
    %19 = arith.addf %18, %9 : vector<8x8xf32>
    %cst_14 = arith.constant dense<0xFF800000> : vector<8xf32>
    %20 = vector.multi_reduction <maximumf>, %19, %cst_14 [1] : vector<8x8xf32> to vector<8xf32>
    %21 = vector.shape_cast %20 : vector<8xf32> to vector<8x1xf32>
    %22 = vector.broadcast %21 : vector<8x1xf32> to vector<8x8xf32>
    %23 = arith.subf %19, %22 : vector<8x8xf32>
    %24 = math.exp %23 : vector<8x8xf32>
    %cst_15 = arith.constant dense<0.000000e+00> : vector<8xf32>
    %25 = vector.multi_reduction <add>, %24, %cst_15 [1] : vector<8x8xf32> to vector<8xf32>
    %26 = vector.shape_cast %25 : vector<8xf32> to vector<8x1xf32>
    %27 = tpu.reciprocal %26 {approx = true} : vector<8x1xf32> -> vector<8x1xf32>
    %28 = vector.broadcast %27 : vector<8x1xf32> to vector<8x8xf32>
    %29 = arith.mulf %24, %28 : vector<8x8xf32>
    %30 = arith.truncf %29 : vector<8x8xf32> to vector<8x8xbf16>
    "tpu.trace_start"() <{level = 10 : i32, message = "st,td->sd"}> : () -> ()
    %cst_16 = arith.constant dense<0.000000e+00> : vector<8x16xf32>
    %31 = tpu.matmul %30, %15, %cst_16 {dimension_numbers = #tpu.dot_dimension_numbers<[1], [0], [0], [1], [0, 0, 1, 1], [], []>} : vector<8x8xbf16>, vector<8x16xbf16>, vector<8x16xf32> -> vector<8x16xf32>
    "tpu.trace_stop"() : () -> ()
    %c0_17 = arith.constant 0 : index
    %c0_18 = arith.constant 0 : index
    %c16 = arith.constant 16 : index
    %32 = vector.load %arg2[%c0_17, %c0_18, %c16] : memref<1x8x32xbf16, #tpu.memory_space<vmem>>, vector<1x8x16xbf16>
    %33 = vector.shape_cast %32 : vector<1x8x16xbf16> to vector<8x16xbf16>
    %c0_19 = arith.constant 0 : index
    %c0_20 = arith.constant 0 : index
    %c16_21 = arith.constant 16 : index
    %34 = vector.load %arg3[%c0_19, %c0_20, %c16_21] : memref<1x8x32xbf16, #tpu.memory_space<vmem>>, vector<1x8x16xbf16>
    %35 = vector.shape_cast %34 : vector<1x8x16xbf16> to vector<8x16xbf16>
    %c0_22 = arith.constant 0 : index
    %c0_23 = arith.constant 0 : index
    %c16_24 = arith.constant 16 : index
    %36 = vector.load %arg4[%c0_22, %c0_23, %c16_24] : memref<1x8x32xbf16, #tpu.memory_space<vmem>>, vector<1x8x16xbf16>
    %37 = vector.shape_cast %36 : vector<1x8x16xbf16> to vector<8x16xbf16>
    "tpu.trace_start"() <{level = 10 : i32, message = "sd,td->st"}> : () -> ()
    %cst_25 = arith.constant dense<0.000000e+00> : vector<8x8xf32>
    %38 = tpu.matmul %33, %35, %cst_25 {dimension_numbers = #tpu.dot_dimension_numbers<[1], [1], [0], [0], [0, 0, 1, 0], [], []>} : vector<8x16xbf16>, vector<8x16xbf16>, vector<8x8xf32> -> vector<8x8xf32>
    "tpu.trace_stop"() : () -> ()
    %cst_26 = arith.constant 2.500000e-01 : f32
    %39 = vector.broadcast %cst_26 : f32 to vector<8x8xf32>
    %40 = arith.mulf %38, %39 : vector<8x8xf32>
    %41 = arith.addf %40, %9 : vector<8x8xf32>
    %cst_27 = arith.constant dense<0xFF800000> : vector<8xf32>
    %42 = vector.multi_reduction <maximumf>, %41, %cst_27 [1] : vector<8x8xf32> to vector<8xf32>
    %43 = vector.shape_cast %42 : vector<8xf32> to vector<8x1xf32>
    %44 = vector.broadcast %43 : vector<8x1xf32> to vector<8x8xf32>
    %45 = arith.subf %41, %44 : vector<8x8xf32>
    %46 = math.exp %45 : vector<8x8xf32>
    %cst_28 = arith.constant dense<0.000000e+00> : vector<8xf32>
    %47 = vector.multi_reduction <add>, %46, %cst_28 [1] : vector<8x8xf32> to vector<8xf32>
    %48 = vector.shape_cast %47 : vector<8xf32> to vector<8x1xf32>
    %49 = tpu.reciprocal %48 {approx = true} : vector<8x1xf32> -> vector<8x1xf32>
    %50 = vector.broadcast %49 : vector<8x1xf32> to vector<8x8xf32>
    %51 = arith.mulf %46, %50 : vector<8x8xf32>
    %52 = arith.truncf %51 : vector<8x8xf32> to vector<8x8xbf16>
    "tpu.trace_start"() <{level = 10 : i32, message = "st,td->sd"}> : () -> ()
    %cst_29 = arith.constant dense<0.000000e+00> : vector<8x16xf32>
    %53 = tpu.matmul %52, %37, %cst_29 {dimension_numbers = #tpu.dot_dimension_numbers<[1], [0], [0], [1], [0, 0, 1, 1], [], []>} : vector<8x8xbf16>, vector<8x16xbf16>, vector<8x16xf32> -> vector<8x16xf32>
    "tpu.trace_stop"() : () -> ()
    %54 = tpu.concatenate %31, %53 in 1 : vector<8x16xf32>, vector<8x16xf32> -> vector<8x32xf32>
    %55 = arith.truncf %54 : vector<8x32xf32> to vector<8x32xbf16>
    %c0_30 = arith.constant 0 : index
    %c0_31 = arith.constant 0 : index
    %c0_32 = arith.constant 0 : index
    %56 = vector.load %arg6[%c0_30, %c0_31, %c0_32] : memref<1x8x32xbf16, #tpu.memory_space<vmem>>, vector<1x8x32xbf16>
    %57 = vector.shape_cast %56 : vector<1x8x32xbf16> to vector<8x32xbf16>
    %58 = vector.shape_cast %55 : vector<8x32xbf16> to vector<1x8x32xbf16>
    tpu.vector_store %arg6[%c0_30, %c0_31, %c0_32], %58 {strides = array<i32>} : memref<1x8x32xbf16, #tpu.memory_space<vmem>>, vector<1x8x32xbf16>,
    return
  }
  func.func @transform_0(%arg0: i32, %arg1: i32) -> (i32, i32, i32) {
    %c0_i32 = arith.constant 0 : i32
    %c0_i32_0 = arith.constant 0 : i32
    return %arg0, %c0_i32, %arg1 : i32, i32, i32
  }
  func.func @transform_1(%arg0: i32, %arg1: i32) -> (i32, i32, i32) {
    %c0_i32 = arith.constant 0 : i32
    %c0_i32_0 = arith.constant 0 : i32
    return %arg0, %c0_i32, %arg1 : i32, i32, i32
  }
  func.func @transform_2(%arg0: i32, %arg1: i32) -> (i32, i32, i32) {
    %c0_i32 = arith.constant 0 : i32
    %c0_i32_0 = arith.constant 0 : i32
    return %arg0, %c0_i32, %arg1 : i32, i32, i32
  }
  func.func @transform_3(%arg0: i32, %arg1: i32) -> (i32, i32, i32) {
    %c0_i32 = arith.constant 0 : i32
    %c0_i32_0 = arith.constant 0 : i32
    %c0_i32_1 = arith.constant 0 : i32
    return %arg0, %c0_i32, %c0_i32_0 : i32, i32, i32
  }
  func.func @transform_4(%arg0: i32, %arg1: i32) -> (i32, i32, i32) {
    %c0_i32 = arith.constant 0 : i32
    %c0_i32_0 = arith.constant 0 : i32
    return %arg0, %c0_i32, %arg1 : i32, i32, i32
  }
}

module attributes {stable_mosaic.version = 11 : i64} {
  func.func @_matmul_resid_single_k_kernel(%arg0: i32, %arg1: i32, %arg2: memref<16x32xbf16, #tpu.memory_space<vmem>>, %arg3: memref<32x32xbf16, #tpu.memory_space<vmem>>, %arg4: memref<1x32xf32, #tpu.memory_space<vmem>>, %arg5: memref<16x32xbf16, #tpu.memory_space<vmem>>, %arg6: memref<16x32xbf16, #tpu.memory_space<vmem>>) attributes {dimension_semantics = [#tpu.dimension_semantics<parallel>, #tpu.dimension_semantics<parallel>], iteration_bounds = array<i64: 1, 1>, scalar_prefetch = 0 : i64, scratch_operands = 0 : i64, tpu.core_type = #tpu.core_type<tc>, window_params = [{transform_indices = @transform_0, window_bounds = array<i64: 16, 32>}, {transform_indices = @transform_1, window_bounds = array<i64: 32, 32>}, {transform_indices = @transform_2, window_bounds = array<i64: 1, 32>}, {transform_indices = @transform_3, window_bounds = array<i64: 16, 32>}, {transform_indices = @transform_4, window_bounds = array<i64: 16, 32>}]} {
    %c0 = arith.constant 0 : index
    %c0_0 = arith.constant 0 : index
    %0 = vector.load %arg2[%c0, %c0_0] : memref<16x32xbf16, #tpu.memory_space<vmem>>, vector<16x32xbf16>
    %c0_1 = arith.constant 0 : index
    %c0_2 = arith.constant 0 : index
    %1 = vector.load %arg3[%c0_1, %c0_2] : memref<32x32xbf16, #tpu.memory_space<vmem>>, vector<32x32xbf16>
    %cst = arith.constant dense<0.000000e+00> : vector<16x32xf32>
    %2 = tpu.matmul %0, %1, %cst {dimension_numbers = #tpu.dot_dimension_numbers<[1], [0], [0], [1], [0, 0, 1, 1], [], []>} : vector<16x32xbf16>, vector<32x32xbf16>, vector<16x32xf32> -> vector<16x32xf32>
    %c0_3 = arith.constant 0 : index
    %c0_4 = arith.constant 0 : index
    %3 = vector.load %arg4[%c0_3, %c0_4] : memref<1x32xf32, #tpu.memory_space<vmem>>, vector<1x32xf32>
    %4 = vector.broadcast %3 : vector<1x32xf32> to vector<16x32xf32>
    %5 = arith.addf %2, %4 : vector<16x32xf32>
    %c0_5 = arith.constant 0 : index
    %c0_6 = arith.constant 0 : index
    %6 = vector.load %arg5[%c0_5, %c0_6] : memref<16x32xbf16, #tpu.memory_space<vmem>>, vector<16x32xbf16>
    %7 = arith.extf %6 : vector<16x32xbf16> to vector<16x32xf32>
    %8 = arith.addf %5, %7 : vector<16x32xf32>
    %9 = arith.truncf %8 : vector<16x32xf32> to vector<16x32xbf16>
    %c0_7 = arith.constant 0 : index
    %c0_8 = arith.constant 0 : index
    %10 = vector.load %arg6[%c0_7, %c0_8] : memref<16x32xbf16, #tpu.memory_space<vmem>>, vector<16x32xbf16>
    tpu.vector_store %arg6[%c0_7, %c0_8], %9 {strides = array<i32>} : memref<16x32xbf16, #tpu.memory_space<vmem>>, vector<16x32xbf16>,
    return
  }
  func.func @transform_0(%arg0: i32, %arg1: i32) -> (i32, i32) {
    %c0_i32 = arith.constant 0 : i32
    %c0_i32_0 = arith.constant 0 : i32
    return %arg0, %c0_i32 : i32, i32
  }
  func.func @transform_1(%arg0: i32, %arg1: i32) -> (i32, i32) {
    %c0_i32 = arith.constant 0 : i32
    %c0_i32_0 = arith.constant 0 : i32
    return %c0_i32, %arg1 : i32, i32
  }
  func.func @transform_2(%arg0: i32, %arg1: i32) -> (i32, i32) {
    %c0_i32 = arith.constant 0 : i32
    %c0_i32_0 = arith.constant 0 : i32
    return %c0_i32, %arg1 : i32, i32
  }
  func.func @transform_3(%arg0: i32, %arg1: i32) -> (i32, i32) {
    %c0_i32 = arith.constant 0 : i32
    return %arg0, %arg1 : i32, i32
  }
  func.func @transform_4(%arg0: i32, %arg1: i32) -> (i32, i32) {
    %c0_i32 = arith.constant 0 : i32
    return %arg0, %arg1 : i32, i32
  }
}

module attributes {stable_mosaic.version = 11 : i64} {
  func.func @_ln_qkv_kernel(%arg0: i32, %arg1: i32, %arg2: memref<16x32xbf16, #tpu.memory_space<vmem>>, %arg3: memref<1x32xf32, #tpu.memory_space<vmem>>, %arg4: memref<1x32xf32, #tpu.memory_space<vmem>>, %arg5: memref<32x32xbf16, #tpu.memory_space<vmem>>, %arg6: memref<32x32xbf16, #tpu.memory_space<vmem>>, %arg7: memref<32x32xbf16, #tpu.memory_space<vmem>>, %arg8: memref<1x32xf32, #tpu.memory_space<vmem>>, %arg9: memref<1x32xf32, #tpu.memory_space<vmem>>, %arg10: memref<1x32xf32, #tpu.memory_space<vmem>>, %arg11: memref<16x32xbf16, #tpu.memory_space<vmem>>, %arg12: memref<16x32xbf16, #tpu.memory_space<vmem>>, %arg13: memref<16x32xbf16, #tpu.memory_space<vmem>>) attributes {dimension_semantics = [#tpu.dimension_semantics<parallel>, #tpu.dimension_semantics<parallel>], iteration_bounds = array<i64: 1, 1>, scalar_prefetch = 0 : i64, scratch_operands = 0 : i64, tpu.core_type = #tpu.core_type<tc>, window_params = [{transform_indices = @transform_0, window_bounds = array<i64: 16, 32>}, {pipeline_mode = #tpu.pipeline_mode<synchronous>, transform_indices = @transform_1, window_bounds = array<i64: 1, 32>}, {pipeline_mode = #tpu.pipeline_mode<synchronous>, transform_indices = @transform_2, window_bounds = array<i64: 1, 32>}, {transform_indices = @transform_3, window_bounds = array<i64: 32, 32>}, {transform_indices = @transform_4, window_bounds = array<i64: 32, 32>}, {transform_indices = @transform_5, window_bounds = array<i64: 32, 32>}, {transform_indices = @transform_6, window_bounds = array<i64: 1, 32>}, {transform_indices = @transform_7, window_bounds = array<i64: 1, 32>}, {transform_indices = @transform_8, window_bounds = array<i64: 1, 32>}, {transform_indices = @transform_9, window_bounds = array<i64: 16, 32>}, {transform_indices = @transform_10, window_bounds = array<i64: 16, 32>}, {transform_indices = @transform_11, window_bounds = array<i64: 16, 32>}]} {
    %c0 = arith.constant 0 : index
    %c0_0 = arith.constant 0 : index
    %0 = vector.load %arg2[%c0, %c0_0] : memref<16x32xbf16, #tpu.memory_space<vmem>>, vector<16x32xbf16>
    %1 = arith.extf %0 : vector<16x32xbf16> to vector<16x32xf32>
    %c0_1 = arith.constant 0 : index
    %c0_2 = arith.constant 0 : index
    %2 = vector.load %arg3[%c0_1, %c0_2] : memref<1x32xf32, #tpu.memory_space<vmem>>, vector<1x32xf32>
    %c0_3 = arith.constant 0 : index
    %c0_4 = arith.constant 0 : index
    %3 = vector.load %arg4[%c0_3, %c0_4] : memref<1x32xf32, #tpu.memory_space<vmem>>, vector<1x32xf32>
    %cst = arith.constant dense<0.000000e+00> : vector<16xf32>
    %4 = vector.multi_reduction <add>, %1, %cst [1] : vector<16x32xf32> to vector<16xf32>
    %5 = vector.shape_cast %4 : vector<16xf32> to vector<16x1xf32>
    %cst_5 = arith.constant 3.200000e+01 : f32
    %6 = vector.broadcast %cst_5 : f32 to vector<16x1xf32>
    %7 = arith.divf %5, %6 : vector<16x1xf32>
    %8 = vector.broadcast %7 : vector<16x1xf32> to vector<16x32xf32>
    %9 = arith.subf %1, %8 : vector<16x32xf32>
    %10 = arith.mulf %9, %9 : vector<16x32xf32>
    %cst_6 = arith.constant dense<0.000000e+00> : vector<16xf32>
    %11 = vector.multi_reduction <add>, %10, %cst_6 [1] : vector<16x32xf32> to vector<16xf32>
    %12 = vector.shape_cast %11 : vector<16xf32> to vector<16x1xf32>
    %cst_7 = arith.constant 3.200000e+01 : f32
    %13 = vector.broadcast %cst_7 : f32 to vector<16x1xf32>
    %14 = arith.divf %12, %13 : vector<16x1xf32>
    %15 = vector.broadcast %7 : vector<16x1xf32> to vector<16x32xf32>
    %16 = arith.subf %1, %15 : vector<16x32xf32>
    %cst_8 = arith.constant 9.99999974E-6 : f32
    %17 = vector.broadcast %cst_8 : f32 to vector<16x1xf32>
    %18 = arith.addf %14, %17 : vector<16x1xf32>
    %19 = math.rsqrt %18 : vector<16x1xf32>
    %20 = vector.broadcast %19 : vector<16x1xf32> to vector<16x32xf32>
    %21 = arith.mulf %16, %20 : vector<16x32xf32>
    %22 = vector.broadcast %2 : vector<1x32xf32> to vector<16x32xf32>
    %23 = arith.mulf %21, %22 : vector<16x32xf32>
    %24 = vector.broadcast %3 : vector<1x32xf32> to vector<16x32xf32>
    %25 = arith.addf %23, %24 : vector<16x32xf32>
    %26 = arith.truncf %25 : vector<16x32xf32> to vector<16x32xbf16>
    %c0_9 = arith.constant 0 : index
    %c0_10 = arith.constant 0 : index
    %27 = vector.load %arg5[%c0_9, %c0_10] : memref<32x32xbf16, #tpu.memory_space<vmem>>, vector<32x32xbf16>
    %cst_11 = arith.constant dense<0.000000e+00> : vector<16x32xf32>
    %28 = tpu.matmul %26, %27, %cst_11 {dimension_numbers = #tpu.dot_dimension_numbers<[1], [0], [0], [1], [0, 0, 1, 1], [], []>} : vector<16x32xbf16>, vector<32x32xbf16>, vector<16x32xf32> -> vector<16x32xf32>
    %c0_12 = arith.constant 0 : index
    %c0_13 = arith.constant 0 : index
    %29 = vector.load %arg8[%c0_12, %c0_13] : memref<1x32xf32, #tpu.memory_space<vmem>>, vector<1x32xf32>
    %30 = vector.broadcast %29 : vector<1x32xf32> to vector<16x32xf32>
    %31 = arith.addf %28, %30 : vector<16x32xf32>
    %32 = arith.truncf %31 : vector<16x32xf32> to vector<16x32xbf16>
    %c0_14 = arith.constant 0 : index
    %c0_15 = arith.constant 0 : index
    %33 = vector.load %arg11[%c0_14, %c0_15] : memref<16x32xbf16, #tpu.memory_space<vmem>>, vector<16x32xbf16>
    tpu.vector_store %arg11[%c0_14, %c0_15], %32 {strides = array<i32>} : memref<16x32xbf16, #tpu.memory_space<vmem>>, vector<16x32xbf16>,
    %c0_16 = arith.constant 0 : index
    %c0_17 = arith.constant 0 : index
    %34 = vector.load %arg6[%c0_16, %c0_17] : memref<32x32xbf16, #tpu.memory_space<vmem>>, vector<32x32xbf16>
    %cst_18 = arith.constant dense<0.000000e+00> : vector<16x32xf32>
    %35 = tpu.matmul %26, %34, %cst_18 {dimension_numbers = #tpu.dot_dimension_numbers<[1], [0], [0], [1], [0, 0, 1, 1], [], []>} : vector<16x32xbf16>, vector<32x32xbf16>, vector<16x32xf32> -> vector<16x32xf32>
    %c0_19 = arith.constant 0 : index
    %c0_20 = arith.constant 0 : index
    %36 = vector.load %arg9[%c0_19, %c0_20] : memref<1x32xf32, #tpu.memory_space<vmem>>, vector<1x32xf32>
    %37 = vector.broadcast %36 : vector<1x32xf32> to vector<16x32xf32>
    %38 = arith.addf %35, %37 : vector<16x32xf32>
    %39 = arith.truncf %38 : vector<16x32xf32> to vector<16x32xbf16>
    %c0_21 = arith.constant 0 : index
    %c0_22 = arith.constant 0 : index
    %40 = vector.load %arg12[%c0_21, %c0_22] : memref<16x32xbf16, #tpu.memory_space<vmem>>, vector<16x32xbf16>
    tpu.vector_store %arg12[%c0_21, %c0_22], %39 {strides = array<i32>} : memref<16x32xbf16, #tpu.memory_space<vmem>>, vector<16x32xbf16>,
    %c0_23 = arith.constant 0 : index
    %c0_24 = arith.constant 0 : index
    %41 = vector.load %arg7[%c0_23, %c0_24] : memref<32x32xbf16, #tpu.memory_space<vmem>>, vector<32x32xbf16>
    %cst_25 = arith.constant dense<0.000000e+00> : vector<16x32xf32>
    %42 = tpu.matmul %26, %41, %cst_25 {dimension_numbers = #tpu.dot_dimension_numbers<[1], [0], [0], [1], [0, 0, 1, 1], [], []>} : vector<16x32xbf16>, vector<32x32xbf16>, vector<16x32xf32> -> vector<16x32xf32>
    %c0_26 = arith.constant 0 : index
    %c0_27 = arith.constant 0 : index
    %43 = vector.load %arg10[%c0_26, %c0_27] : memref<1x32xf32, #tpu.memory_space<vmem>>, vector<1x32xf32>
    %44 = vector.broadcast %43 : vector<1x32xf32> to vector<16x32xf32>
    %45 = arith.addf %42, %44 : vector<16x32xf32>
    %46 = arith.truncf %45 : vector<16x32xf32> to vector<16x32xbf16>
    %c0_28 = arith.constant 0 : index
    %c0_29 = arith.constant 0 : index
    %47 = vector.load %arg13[%c0_28, %c0_29] : memref<16x32xbf16, #tpu.memory_space<vmem>>, vector<16x32xbf16>
    tpu.vector_store %arg13[%c0_28, %c0_29], %46 {strides = array<i32>} : memref<16x32xbf16, #tpu.memory_space<vmem>>, vector<16x32xbf16>,
    return
  }
  func.func @transform_0(%arg0: i32, %arg1: i32) -> (i32, i32) {
    %c0_i32 = arith.constant 0 : i32
    %c0_i32_0 = arith.constant 0 : i32
    return %arg0, %c0_i32 : i32, i32
  }
  func.func @transform_1(%arg0: i32, %arg1: i32) -> (i32, i32) {
    %c0_i32 = arith.constant 0 : i32
    %c0_i32_0 = arith.constant 0 : i32
    %c0_i32_1 = arith.constant 0 : i32
    return %c0_i32, %c0_i32_0 : i32, i32
  }
  func.func @transform_2(%arg0: i32, %arg1: i32) -> (i32, i32) {
    %c0_i32 = arith.constant 0 : i32
    %c0_i32_0 = arith.constant 0 : i32
    %c0_i32_1 = arith.constant 0 : i32
    return %c0_i32, %c0_i32_0 : i32, i32
  }
  func.func @transform_3(%arg0: i32, %arg1: i32) -> (i32, i32) {
    %c0_i32 = arith.constant 0 : i32
    %c0_i32_0 = arith.constant 0 : i32
    return %c0_i32, %arg1 : i32, i32
  }
  func.func @transform_4(%arg0: i32, %arg1: i32) -> (i32, i32) {
    %c0_i32 = arith.constant 0 : i32
    %c0_i32_0 = arith.constant 0 : i32
    return %c0_i32, %arg1 : i32, i32
  }
  func.func @transform_5(%arg0: i32, %arg1: i32) -> (i32, i32) {
    %c0_i32 = arith.constant 0 : i32
    %c0_i32_0 = arith.constant 0 : i32
    return %c0_i32, %arg1 : i32, i32
  }
  func.func @transform_6(%arg0: i32, %arg1: i32) -> (i32, i32) {
    %c0_i32 = arith.constant 0 : i32
    %c0_i32_0 = arith.constant 0 : i32
    return %c0_i32, %arg1 : i32, i32
  }
  func.func @transform_7(%arg0: i32, %arg1: i32) -> (i32, i32) {
    %c0_i32 = arith.constant 0 : i32
    %c0_i32_0 = arith.constant 0 : i32
    return %c0_i32, %arg1 : i32, i32
  }
  func.func @transform_8(%arg0: i32, %arg1: i32) -> (i32, i32) {
    %c0_i32 = arith.constant 0 : i32
    %c0_i32_0 = arith.constant 0 : i32
    return %c0_i32, %arg1 : i32, i32
  }
  func.func @transform_9(%arg0: i32, %arg1: i32) -> (i32, i32) {
    %c0_i32 = arith.constant 0 : i32
    return %arg0, %arg1 : i32, i32
  }
  func.func @transform_10(%arg0: i32, %arg1: i32) -> (i32, i32) {
    %c0_i32 = arith.constant 0 : i32
    return %arg0, %arg1 : i32, i32
  }
  func.func @transform_11(%arg0: i32, %arg1: i32) -> (i32, i32) {
    %c0_i32 = arith.constant 0 : i32
    return %arg0, %arg1 : i32, i32
  }
}

module attributes {stable_mosaic.version = 11 : i64} {
  func.func @_ln_matmul_gelu_kernel(%arg0: i32, %arg1: i32, %arg2: memref<16x32xbf16, #tpu.memory_space<vmem>>, %arg3: memref<1x32xf32, #tpu.memory_space<vmem>>, %arg4: memref<1x32xf32, #tpu.memory_space<vmem>>, %arg5: memref<32x128xbf16, #tpu.memory_space<vmem>>, %arg6: memref<1x128xf32, #tpu.memory_space<vmem>>, %arg7: memref<16x128xbf16, #tpu.memory_space<vmem>>) attributes {dimension_semantics = [#tpu.dimension_semantics<parallel>, #tpu.dimension_semantics<parallel>], iteration_bounds = array<i64: 1, 1>, scalar_prefetch = 0 : i64, scratch_operands = 0 : i64, tpu.core_type = #tpu.core_type<tc>, window_params = [{transform_indices = @transform_0, window_bounds = array<i64: 16, 32>}, {pipeline_mode = #tpu.pipeline_mode<synchronous>, transform_indices = @transform_1, window_bounds = array<i64: 1, 32>}, {pipeline_mode = #tpu.pipeline_mode<synchronous>, transform_indices = @transform_2, window_bounds = array<i64: 1, 32>}, {transform_indices = @transform_3, window_bounds = array<i64: 32, 128>}, {transform_indices = @transform_4, window_bounds = array<i64: 1, 128>}, {transform_indices = @transform_5, window_bounds = array<i64: 16, 128>}]} {
    %c0 = arith.constant 0 : index
    %c0_0 = arith.constant 0 : index
    %0 = vector.load %arg2[%c0, %c0_0] : memref<16x32xbf16, #tpu.memory_space<vmem>>, vector<16x32xbf16>
    %1 = arith.extf %0 : vector<16x32xbf16> to vector<16x32xf32>
    %c0_1 = arith.constant 0 : index
    %c0_2 = arith.constant 0 : index
    %2 = vector.load %arg3[%c0_1, %c0_2] : memref<1x32xf32, #tpu.memory_space<vmem>>, vector<1x32xf32>
    %c0_3 = arith.constant 0 : index
    %c0_4 = arith.constant 0 : index
    %3 = vector.load %arg4[%c0_3, %c0_4] : memref<1x32xf32, #tpu.memory_space<vmem>>, vector<1x32xf32>
    %cst = arith.constant dense<0.000000e+00> : vector<16xf32>
    %4 = vector.multi_reduction <add>, %1, %cst [1] : vector<16x32xf32> to vector<16xf32>
    %5 = vector.shape_cast %4 : vector<16xf32> to vector<16x1xf32>
    %cst_5 = arith.constant 3.200000e+01 : f32
    %6 = vector.broadcast %cst_5 : f32 to vector<16x1xf32>
    %7 = arith.divf %5, %6 : vector<16x1xf32>
    %8 = vector.broadcast %7 : vector<16x1xf32> to vector<16x32xf32>
    %9 = arith.subf %1, %8 : vector<16x32xf32>
    %10 = arith.mulf %9, %9 : vector<16x32xf32>
    %cst_6 = arith.constant dense<0.000000e+00> : vector<16xf32>
    %11 = vector.multi_reduction <add>, %10, %cst_6 [1] : vector<16x32xf32> to vector<16xf32>
    %12 = vector.shape_cast %11 : vector<16xf32> to vector<16x1xf32>
    %cst_7 = arith.constant 3.200000e+01 : f32
    %13 = vector.broadcast %cst_7 : f32 to vector<16x1xf32>
    %14 = arith.divf %12, %13 : vector<16x1xf32>
    %15 = vector.broadcast %7 : vector<16x1xf32> to vector<16x32xf32>
    %16 = arith.subf %1, %15 : vector<16x32xf32>
    %cst_8 = arith.constant 9.99999974E-6 : f32
    %17 = vector.broadcast %cst_8 : f32 to vector<16x1xf32>
    %18 = arith.addf %14, %17 : vector<16x1xf32>
    %19 = math.rsqrt %18 : vector<16x1xf32>
    %20 = vector.broadcast %19 : vector<16x1xf32> to vector<16x32xf32>
    %21 = arith.mulf %16, %20 : vector<16x32xf32>
    %22 = vector.broadcast %2 : vector<1x32xf32> to vector<16x32xf32>
    %23 = arith.mulf %21, %22 : vector<16x32xf32>
    %24 = vector.broadcast %3 : vector<1x32xf32> to vector<16x32xf32>
    %25 = arith.addf %23, %24 : vector<16x32xf32>
    %26 = arith.truncf %25 : vector<16x32xf32> to vector<16x32xbf16>
    %c0_9 = arith.constant 0 : index
    %c0_10 = arith.constant 0 : index
    %27 = vector.load %arg5[%c0_9, %c0_10] : memref<32x128xbf16, #tpu.memory_space<vmem>>, vector<32x128xbf16>
    %cst_11 = arith.constant dense<0.000000e+00> : vector<16x128xf32>
    %28 = tpu.matmul %26, %27, %cst_11 {dimension_numbers = #tpu.dot_dimension_numbers<[1], [0], [0], [1], [0, 0, 1, 1], [], []>} : vector<16x32xbf16>, vector<32x128xbf16>, vector<16x128xf32> -> vector<16x128xf32>
    %c0_12 = arith.constant 0 : index
    %c0_13 = arith.constant 0 : index
    %29 = vector.load %arg6[%c0_12, %c0_13] : memref<1x128xf32, #tpu.memory_space<vmem>>, vector<1x128xf32>
    %30 = vector.broadcast %29 : vector<1x128xf32> to vector<16x128xf32>
    %31 = arith.addf %28, %30 : vector<16x128xf32>
    %32 = arith.mulf %31, %31 : vector<16x128xf32>
    %33 = arith.mulf %31, %32 : vector<16x128xf32>
    %cst_14 = arith.constant 4.471500e-02 : f32
    %34 = vector.broadcast %cst_14 : f32 to vector<16x128xf32>
    %35 = arith.mulf %34, %33 : vector<16x128xf32>
    %36 = arith.addf %31, %35 : vector<16x128xf32>
    %cst_15 = arith.constant 0.797884583 : f32
    %37 = vector.broadcast %cst_15 : f32 to vector<16x128xf32>
    %38 = arith.mulf %37, %36 : vector<16x128xf32>
    %39 = math.tanh %38 : vector<16x128xf32>
    %cst_16 = arith.constant 1.000000e+00 : f32
    %40 = vector.broadcast %cst_16 : f32 to vector<16x128xf32>
    %41 = arith.addf %40, %39 : vector<16x128xf32>
    %cst_17 = arith.constant 5.000000e-01 : f32
    %42 = vector.broadcast %cst_17 : f32 to vector<16x128xf32>
    %43 = arith.mulf %42, %41 : vector<16x128xf32>
    %44 = arith.mulf %31, %43 : vector<16x128xf32>
    %45 = arith.truncf %44 : vector<16x128xf32> to vector<16x128xbf16>
    %c0_18 = arith.constant 0 : index
    %c0_19 = arith.constant 0 : index
    %46 = vector.load %arg7[%c0_18, %c0_19] : memref<16x128xbf16, #tpu.memory_space<vmem>>, vector<16x128xbf16>
    tpu.vector_store %arg7[%c0_18, %c0_19], %45 {strides = array<i32>} : memref<16x128xbf16, #tpu.memory_space<vmem>>, vector<16x128xbf16>,
    return
  }
  func.func @transform_0(%arg0: i32, %arg1: i32) -> (i32, i32) {
    %c0_i32 = arith.constant 0 : i32
    %c0_i32_0 = arith.constant 0 : i32
    return %arg0, %c0_i32 : i32, i32
  }
  func.func @transform_1(%arg0: i32, %arg1: i32) -> (i32, i32) {
    %c0_i32 = arith.constant 0 : i32
    %c0_i32_0 = arith.constant 0 : i32
    %c0_i32_1 = arith.constant 0 : i32
    return %c0_i32, %c0_i32_0 : i32, i32
  }
  func.func @transform_2(%arg0: i32, %arg1: i32) -> (i32, i32) {
    %c0_i32 = arith.constant 0 : i32
    %c0_i32_0 = arith.constant 0 : i32
    %c0_i32_1 = arith.constant 0 : i32
    return %c0_i32, %c0_i32_0 : i32, i32
  }
  func.func @transform_3(%arg0: i32, %arg1: i32) -> (i32, i32) {
    %c0_i32 = arith.constant 0 : i32
    %c0_i32_0 = arith.constant 0 : i32
    return %c0_i32, %arg1 : i32, i32
  }
  func.func @transform_4(%arg0: i32, %arg1: i32) -> (i32, i32) {
    %c0_i32 = arith.constant 0 : i32
    %c0_i32_0 = arith.constant 0 : i32
    return %c0_i32, %arg1 : i32, i32
  }
  func.func @transform_5(%arg0: i32, %arg1: i32) -> (i32, i32) {
    %c0_i32 = arith.constant 0 : i32
    return %arg0, %arg1 : i32, i32
  }
}

module attributes {stable_mosaic.version = 11 : i64} {
  func.func @_matmul_resid_single_k_kernel(%arg0: i32, %arg1: i32, %arg2: memref<16x128xbf16, #tpu.memory_space<vmem>>, %arg3: memref<128x32xbf16, #tpu.memory_space<vmem>>, %arg4: memref<1x32xf32, #tpu.memory_space<vmem>>, %arg5: memref<16x32xbf16, #tpu.memory_space<vmem>>, %arg6: memref<16x32xbf16, #tpu.memory_space<vmem>>) attributes {dimension_semantics = [#tpu.dimension_semantics<parallel>, #tpu.dimension_semantics<parallel>], iteration_bounds = array<i64: 1, 1>, scalar_prefetch = 0 : i64, scratch_operands = 0 : i64, tpu.core_type = #tpu.core_type<tc>, window_params = [{transform_indices = @transform_0, window_bounds = array<i64: 16, 128>}, {transform_indices = @transform_1, window_bounds = array<i64: 128, 32>}, {transform_indices = @transform_2, window_bounds = array<i64: 1, 32>}, {transform_indices = @transform_3, window_bounds = array<i64: 16, 32>}, {transform_indices = @transform_4, window_bounds = array<i64: 16, 32>}]} {
    %c0 = arith.constant 0 : index
    %c0_0 = arith.constant 0 : index
    %0 = vector.load %arg2[%c0, %c0_0] : memref<16x128xbf16, #tpu.memory_space<vmem>>, vector<16x128xbf16>
    %c0_1 = arith.constant 0 : index
    %c0_2 = arith.constant 0 : index
    %1 = vector.load %arg3[%c0_1, %c0_2] : memref<128x32xbf16, #tpu.memory_space<vmem>>, vector<128x32xbf16>
    %cst = arith.constant dense<0.000000e+00> : vector<16x32xf32>
    %2 = tpu.matmul %0, %1, %cst {dimension_numbers = #tpu.dot_dimension_numbers<[1], [0], [0], [1], [0, 0, 1, 1], [], []>} : vector<16x128xbf16>, vector<128x32xbf16>, vector<16x32xf32> -> vector<16x32xf32>
    %c0_3 = arith.constant 0 : index
    %c0_4 = arith.constant 0 : index
    %3 = vector.load %arg4[%c0_3, %c0_4] : memref<1x32xf32, #tpu.memory_space<vmem>>, vector<1x32xf32>
    %4 = vector.broadcast %3 : vector<1x32xf32> to vector<16x32xf32>
    %5 = arith.addf %2, %4 : vector<16x32xf32>
    %c0_5 = arith.constant 0 : index
    %c0_6 = arith.constant 0 : index
    %6 = vector.load %arg5[%c0_5, %c0_6] : memref<16x32xbf16, #tpu.memory_space<vmem>>, vector<16x32xbf16>
    %7 = arith.extf %6 : vector<16x32xbf16> to vector<16x32xf32>
    %8 = arith.addf %5, %7 : vector<16x32xf32>
    %9 = arith.truncf %8 : vector<16x32xf32> to vector<16x32xbf16>
    %c0_7 = arith.constant 0 : index
    %c0_8 = arith.constant 0 : index
    %10 = vector.load %arg6[%c0_7, %c0_8] : memref<16x32xbf16, #tpu.memory_space<vmem>>, vector<16x32xbf16>
    tpu.vector_store %arg6[%c0_7, %c0_8], %9 {strides = array<i32>} : memref<16x32xbf16, #tpu.memory_space<vmem>>, vector<16x32xbf16>,
    return
  }
  func.func @transform_0(%arg0: i32, %arg1: i32) -> (i32, i32) {
    %c0_i32 = arith.constant 0 : i32
    %c0_i32_0 = arith.constant 0 : i32
    return %arg0, %c0_i32 : i32, i32
  }
  func.func @transform_1(%arg0: i32, %arg1: i32) -> (i32, i32) {
    %c0_i32 = arith.constant 0 : i32
    %c0_i32_0 = arith.constant 0 : i32
    return %c0_i32, %arg1 : i32, i32
  }
  func.func @transform_2(%arg0: i32, %arg1: i32) -> (i32, i32) {
    %c0_i32 = arith.constant 0 : i32
    %c0_i32_0 = arith.constant 0 : i32
    return %c0_i32, %arg1 : i32, i32
  }
  func.func @transform_3(%arg0: i32, %arg1: i32) -> (i32, i32) {
    %c0_i32 = arith.constant 0 : i32
    return %arg0, %arg1 : i32, i32
  }
  func.func @transform_4(%arg0: i32, %arg1: i32) -> (i32, i32) {
    %c0_i32 = arith.constant 0 : i32
    return %arg0, %arg1 : i32, i32
  }
}

module attributes {stable_mosaic.version = 11 : i64} {
  func.func @_layernorm_kernel(%arg0: i32, %arg1: memref<16x32xbf16, #tpu.memory_space<vmem>>, %arg2: memref<1x32xf32, #tpu.memory_space<vmem>>, %arg3: memref<1x32xf32, #tpu.memory_space<vmem>>, %arg4: memref<16x32xf32, #tpu.memory_space<vmem>>) attributes {dimension_semantics = [#tpu.dimension_semantics<parallel>], iteration_bounds = array<i64: 1>, scalar_prefetch = 0 : i64, scratch_operands = 0 : i64, tpu.core_type = #tpu.core_type<tc>, window_params = [{transform_indices = @transform_0, window_bounds = array<i64: 16, 32>}, {pipeline_mode = #tpu.pipeline_mode<synchronous>, transform_indices = @transform_1, window_bounds = array<i64: 1, 32>}, {pipeline_mode = #tpu.pipeline_mode<synchronous>, transform_indices = @transform_2, window_bounds = array<i64: 1, 32>}, {transform_indices = @transform_3, window_bounds = array<i64: 16, 32>}]} {
    %c0 = arith.constant 0 : index
    %c0_0 = arith.constant 0 : index
    %0 = vector.load %arg1[%c0, %c0_0] : memref<16x32xbf16, #tpu.memory_space<vmem>>, vector<16x32xbf16>
    %1 = arith.extf %0 : vector<16x32xbf16> to vector<16x32xf32>
    %c0_1 = arith.constant 0 : index
    %c0_2 = arith.constant 0 : index
    %2 = vector.load %arg2[%c0_1, %c0_2] : memref<1x32xf32, #tpu.memory_space<vmem>>, vector<1x32xf32>
    %c0_3 = arith.constant 0 : index
    %c0_4 = arith.constant 0 : index
    %3 = vector.load %arg3[%c0_3, %c0_4] : memref<1x32xf32, #tpu.memory_space<vmem>>, vector<1x32xf32>
    %cst = arith.constant dense<0.000000e+00> : vector<16xf32>
    %4 = vector.multi_reduction <add>, %1, %cst [1] : vector<16x32xf32> to vector<16xf32>
    %5 = vector.shape_cast %4 : vector<16xf32> to vector<16x1xf32>
    %cst_5 = arith.constant 3.200000e+01 : f32
    %6 = vector.broadcast %cst_5 : f32 to vector<16x1xf32>
    %7 = arith.divf %5, %6 : vector<16x1xf32>
    %8 = vector.broadcast %7 : vector<16x1xf32> to vector<16x32xf32>
    %9 = arith.subf %1, %8 : vector<16x32xf32>
    %10 = arith.mulf %9, %9 : vector<16x32xf32>
    %cst_6 = arith.constant dense<0.000000e+00> : vector<16xf32>
    %11 = vector.multi_reduction <add>, %10, %cst_6 [1] : vector<16x32xf32> to vector<16xf32>
    %12 = vector.shape_cast %11 : vector<16xf32> to vector<16x1xf32>
    %cst_7 = arith.constant 3.200000e+01 : f32
    %13 = vector.broadcast %cst_7 : f32 to vector<16x1xf32>
    %14 = arith.divf %12, %13 : vector<16x1xf32>
    %15 = vector.broadcast %7 : vector<16x1xf32> to vector<16x32xf32>
    %16 = arith.subf %1, %15 : vector<16x32xf32>
    %cst_8 = arith.constant 9.99999974E-6 : f32
    %17 = vector.broadcast %cst_8 : f32 to vector<16x1xf32>
    %18 = arith.addf %14, %17 : vector<16x1xf32>
    %19 = math.rsqrt %18 : vector<16x1xf32>
    %20 = vector.broadcast %19 : vector<16x1xf32> to vector<16x32xf32>
    %21 = arith.mulf %16, %20 : vector<16x32xf32>
    %22 = vector.broadcast %2 : vector<1x32xf32> to vector<16x32xf32>
    %23 = arith.mulf %21, %22 : vector<16x32xf32>
    %24 = vector.broadcast %3 : vector<1x32xf32> to vector<16x32xf32>
    %25 = arith.addf %23, %24 : vector<16x32xf32>
    %c0_9 = arith.constant 0 : index
    %c0_10 = arith.constant 0 : index
    %26 = vector.load %arg4[%c0_9, %c0_10] : memref<16x32xf32, #tpu.memory_space<vmem>>, vector<16x32xf32>
    tpu.vector_store %arg4[%c0_9, %c0_10], %25 {strides = array<i32>} : memref<16x32xf32, #tpu.memory_space<vmem>>, vector<16x32xf32>,
    return
  }
  func.func @transform_0(%arg0: i32) -> (i32, i32) {
    %c0_i32 = arith.constant 0 : i32
    %c0_i32_0 = arith.constant 0 : i32
    return %arg0, %c0_i32 : i32, i32
  }
  func.func @transform_1(%arg0: i32) -> (i32, i32) {
    %c0_i32 = arith.constant 0 : i32
    %c0_i32_0 = arith.constant 0 : i32
    %c0_i32_1 = arith.constant 0 : i32
    return %c0_i32, %c0_i32_0 : i32, i32
  }
  func.func @transform_2(%arg0: i32) -> (i32, i32) {
    %c0_i32 = arith.constant 0 : i32
    %c0_i32_0 = arith.constant 0 : i32
    %c0_i32_1 = arith.constant 0 : i32
    return %c0_i32, %c0_i32_0 : i32, i32
  }
  func.func @transform_3(%arg0: i32) -> (i32, i32) {
    %c0_i32 = arith.constant 0 : i32
    %c0_i32_0 = arith.constant 0 : i32
    return %arg0, %c0_i32 : i32, i32
  }
}

</mosaic_0001>

<llo_original>
// kernel: gpt2_word_encoder_forward.13
$region0: #{gpt2_word_encoder_forward.13}
  #allocation0 [shape = 'u32[]', space=smem, size = 0x4, offset = 0x4, fixed_abs, tag = 'smem constant byte address 0x4 - core index']
  #allocation1 [shape = 'u32[144,128]{1,0:T(1,128)}', space=vmem, size = 0x12000, scoped, tag = 'internal scratch']
  %s0 = inlined_call_operand.vmem [shape: bf16[16,32], index: 0, kind: input, shape index: {}]
  %s1 = inlined_call_operand.vmem [shape: bf16[32,32], index: 1, kind: input, shape index: {}]
  %s2 = inlined_call_operand.vmem [shape: f32[1,32], index: 2, kind: input, shape index: {}]
  %s3 = inlined_call_operand.vmem [shape: bf16[16,32], index: 3, kind: input, shape index: {}]
  %s4 = inlined_call_operand.vmem [shape: bf16[16,32], index: 4, kind: output, shape index: {}]
  %s5 = sld [smem:[#allocation0]]
  $region26: #{gpt2_word_encoder_forward.13} parent=0
    _
  %s7 = ssub.s32 1, %s5
  %s8 = scalar_select 0, %s7, %s5
  // Predicated region
  $region2: #{gpt2_word_encoder_forward.13} parent=0 // pred_check
    _
  $region3: #{gpt2_word_encoder_forward.13} parent=0 // pred_check_branch
    %10 = sbr.rel (0) target = $region5
  $region4: #{gpt2_word_encoder_forward.13} parent=0 // pred_region
    _
  $region5: #{gpt2_word_encoder_forward.13} parent=0 // pred_fallthru
    _
  // Predicated region
  $region6: #{gpt2_word_encoder_forward.13} parent=0 // pred_check
    _
  $region7: #{gpt2_word_encoder_forward.13} parent=0 // pred_check_branch
    %12 = sbr.rel (0) target = $region9
  $region8: #{gpt2_word_encoder_forward.13} parent=0 // pred_region
    _
  $region9: #{gpt2_word_encoder_forward.13} parent=0 // pred_fallthru
    _
  // Predicated region
  $region10: #{gpt2_word_encoder_forward.13} parent=0 // pred_check
    _
  $region11: #{gpt2_word_encoder_forward.13} parent=0 // pred_check_branch
    %14 = sbr.rel (0) target = $region13
  $region12: #{gpt2_word_encoder_forward.13} parent=0 // pred_region
    _
  $region13: #{gpt2_word_encoder_forward.13} parent=0 // pred_fallthru
    _
  // Predicated region
  $region14: #{gpt2_word_encoder_forward.13} parent=0 // pred_check
    _
  $region15: #{gpt2_word_encoder_forward.13} parent=0 // pred_check_branch
    %16 = sbr.rel (0) target = $region17
  $region16: #{gpt2_word_encoder_forward.13} parent=0 // pred_region
    _
  $region17: #{gpt2_word_encoder_forward.13} parent=0 // pred_fallthru
    _
  %v18 = vld [vmem:[%s0] sm:$0xf]
  %v19 = vld [vmem:[%s0 + $0x4] sm:$0xf]
  %v20 = vld [vmem:[%s1] sm:$0xf]
  %v21 = vld [vmem:[%s1 + $0x4] sm:$0xf]
  %v22 = vld [vmem:[%s1 + $0x8] sm:$0xf]
  %v23 = vld [vmem:[%s1 + $0xc] sm:$0xf]
  %v24 = vld [vmem:[%s2] sm:$0x1]
  %v26 = vlaneseq
  %v27 = vshrl.u32 %v26, 7
  %v28 = vsub.s32 0, %v27
  %v29 = vrot.slane %v24, %v28
  %v33 = vunpack.c.l.b16 %v18
  %v34 = vunpack.c.l.b16 %v19
  %v35 = vpack.c.b16 %v34, %v33
  %v40 = vunpack.c.l.b16 %v20
  %v41 = vunpack.c.l.b16 %v21
  %v42 = vunpack.c.l.b16 %v22
  %v43 = vunpack.c.l.b16 %v23
  %v44 = vpack.c.b16 %v41, %v40
  %v45 = vpack.c.b16 %v43, %v42
  %vm48 = vcmask 261120
  %v50 = vsel %vm48, %v35, 0
  %52 = vmatprep.subr.bf16.mxu0 0
  %53 = vmatpush1.bf16.msra.mxu0 %v44
  %54 = vmatprep.subr.bf16.mxu0 0
  %55 = vmatpush1.bf16.msra.mxu0 %v45
  %56 = vmatprep.subr.bf16.mxu0 0
  %57 = vmatpush1.bf16.msra.mxu0 0
  %58 = vmatprep.subr.bf16.mxu0 0
  %59 = vmatpush1.bf16.msra.mxu0 0
  %60 = vmatprep.subr.bf16.mxu0 0
  %61 = vmatpush1.bf16.msra.mxu0 0
  %62 = vmatprep.subr.bf16.mxu0 0
  %63 = vmatpush1.bf16.msra.mxu0 0
  %64 = vmatprep.subr.bf16.mxu0 0
  %65 = vmatpush1.bf16.msra.mxu0 0
  %66 = vmatprep.subr.bf16.mxu0 0
  %67 = vmatpush1.bf16.msra.mxu0 0
  %68 = vmatprep.subr.bf16.mxu0 0
  %69 = vmatpush1.bf16.msra.mxu0 0
  %70 = vmatprep.subr.bf16.mxu0 0
  %71 = vmatpush1.bf16.msra.mxu0 0
  %72 = vmatprep.subr.bf16.mxu0 0
  %73 = vmatpush1.bf16.msra.mxu0 0
  %74 = vmatprep.subr.bf16.mxu0 0
  %75 = vmatpush1.bf16.msra.mxu0 0
  %76 = vmatprep.subr.bf16.mxu0 0
  %77 = vmatpush1.bf16.msra.mxu0 0
  %78 = vmatprep.subr.bf16.mxu0 0
  %79 = vmatpush1.bf16.msra.mxu0 0
  %80 = vmatprep.subr.bf16.mxu0 0
  %81 = vmatpush1.bf16.msra.mxu0 0
  %82 = vmatprep.subr.bf16.mxu0 0
  %83 = vmatpush1.bf16.msra.mxu0 0
  %84 = vmatprep.mubr.bf16.mxu0 0
  %85 = vmatmul.mubr.bf16.gmra.mrb[0].mxu0 %v50
  %v86 = vpop.f32.mrb[0].mxu0
  %v87 = vadd.f32 %v29, %v86
  %v88 = vpop.f32.mrb[0].mxu0
  %v89 = vpop.f32.mrb[0].mxu0
  %v90 = vadd.f32 %v29, %v89
  %v91 = vpop.f32.mrb[0].mxu0
  %92 = vdwg.mxu0
  %v93 = vld [vmem:[%s3] sm:$0xf]
  %v94 = vld [vmem:[%s3 + $0x4] sm:$0xf]
  %v95 = vunpack.c.l.bf16 %v93
  %v96 = vunpack.c.l.bf16 %v94
  %v97 = vadd.f32 %v87, %v95
  %v98 = vadd.f32 %v90, %v96
  %v99 = vpack.c.bf16 %v98, %v97
  %v101 = vunpack.c.l.b16 %v99
  %v102 = vunpack.c.h.b16 %v99
  %v103 = vpack.c.b16 %v101, %v101
  %v104 = vpack.c.b16 %v102, %v102
  %vm107 = vcmask 257024
  %108 = vst.msk [vmem:[%s4] sm:$0xf] %vm107, %v103
  %109 = vst.msk [vmem:[%s4 + $0x4] sm:$0xf] %vm107, %v104
  // Predicated region
  $region18: #{gpt2_word_encoder_forward.13} parent=0 // pred_check
    _
  $region19: #{gpt2_word_encoder_forward.13} parent=0 // pred_check_branch
    %111 = sbr.rel (0) target = $region21
  $region20: #{gpt2_word_encoder_forward.13} parent=0 // pred_region
    _
  $region21: #{gpt2_word_encoder_forward.13} parent=0 // pred_fallthru
    _
  // Predicated region
  $region22: #{gpt2_word_encoder_forward.13} parent=0 // pred_check
    _
  $region23: #{gpt2_word_encoder_forward.13} parent=0 // pred_check_branch
    %113 = sbr.rel (0) target = $region25
  $region24: #{gpt2_word_encoder_forward.13} parent=0 // pred_region
    _
  $region25: #{gpt2_word_encoder_forward.13} parent=0 // pred_fallthru
    _

// kernel: gpt2_word_encoder_forward.14
$region0: #{gpt2_word_encoder_forward.14}
  #allocation0 [shape = 'u32[]', space=smem, size = 0x4, offset = 0x4, fixed_abs, tag = 'smem constant byte address 0x4 - core index']
  #allocation1 [shape = 'u32[144,128]{1,0:T(1,128)}', space=vmem, size = 0x12000, scoped, tag = 'internal scratch']
  %s0 = inlined_call_operand.vmem [shape: bf16[16,32], index: 0, kind: input, shape index: {}]
  %s1 = inlined_call_operand.vmem [shape: f32[1,32], index: 1, kind: input, shape index: {}]
  %s2 = inlined_call_operand.vmem [shape: f32[1,32], index: 2, kind: input, shape index: {}]
  %s3 = inlined_call_operand.vmem [shape: bf16[32,128], index: 3, kind: input, shape index: {}]
  %s4 = inlined_call_operand.vmem [shape: f32[1,128], index: 4, kind: input, shape index: {}]
  %s5 = inlined_call_operand.vmem [shape: bf16[16,128], index: 5, kind: output, shape index: {}]
  %s6 = sld [smem:[#allocation0]]
  $region30: #{gpt2_word_encoder_forward.14} parent=0
    _
  %s8 = ssub.s32 1, %s6
  %s9 = scalar_select 0, %s8, %s6
  // Predicated region
  $region2: #{gpt2_word_encoder_forward.14} parent=0 // pred_check
    _
  $region3: #{gpt2_word_encoder_forward.14} parent=0 // pred_check_branch
    %11 = sbr.rel (0) target = $region5
  $region4: #{gpt2_word_encoder_forward.14} parent=0 // pred_region
    _
  $region5: #{gpt2_word_encoder_forward.14} parent=0 // pred_fallthru
    _
  // Predicated region
  $region6: #{gpt2_word_encoder_forward.14} parent=0 // pred_check
    _
  $region7: #{gpt2_word_encoder_forward.14} parent=0 // pred_check_branch
    %13 = sbr.rel (0) target = $region9
  $region8: #{gpt2_word_encoder_forward.14} parent=0 // pred_region
    _
  $region9: #{gpt2_word_encoder_forward.14} parent=0 // pred_fallthru
    _
  // Predicated region
  $region10: #{gpt2_word_encoder_forward.14} parent=0 // pred_check
    _
  $region11: #{gpt2_word_encoder_forward.14} parent=0 // pred_check_branch
    %15 = sbr.rel (0) target = $region13
  $region12: #{gpt2_word_encoder_forward.14} parent=0 // pred_region
    _
  $region13: #{gpt2_word_encoder_forward.14} parent=0 // pred_fallthru
    _
  // Predicated region
  $region14: #{gpt2_word_encoder_forward.14} parent=0 // pred_check
    _
  $region15: #{gpt2_word_encoder_forward.14} parent=0 // pred_check_branch
    %17 = sbr.rel (0) target = $region17
  $region16: #{gpt2_word_encoder_forward.14} parent=0 // pred_region
    _
  $region17: #{gpt2_word_encoder_forward.14} parent=0 // pred_fallthru
    _
  // Predicated region
  $region18: #{gpt2_word_encoder_forward.14} parent=0 // pred_check
    _
  $region19: #{gpt2_word_encoder_forward.14} parent=0 // pred_check_branch
    %19 = sbr.rel (0) target = $region21
  $region20: #{gpt2_word_encoder_forward.14} parent=0 // pred_region
    _
  $region21: #{gpt2_word_encoder_forward.14} parent=0 // pred_fallthru
    _
  %v21 = vld [vmem:[%s0] sm:$0xf]
  %v22 = vld [vmem:[%s0 + $0x4] sm:$0xf]
  %v23 = vunpack.c.l.bf16 %v21
  %v24 = vunpack.c.l.bf16 %v22
  %v25 = vld [vmem:[%s1] sm:$0x1]
  %v26 = vld [vmem:[%s2] sm:$0x1]
  %vm27 = vcmask 261120
  %v28 = vsel %vm27, %v23, 0.0
  %29 = vadd.xlane.f32.xlu0 %v28
  %v30 = vpop.xlane.xlu0 %29
  %v31 = vsel %vm27, %v24, 0.0
  %32 = vadd.xlane.f32.xlu0 %v31
  %v33 = vpop.xlane.xlu0 %32
  %v34 = vrcp.pop 32.0
  %v35 = vmul.f32 %v30, %v34
  %v36 = vmul.f32 %v33, %v34
  %v37 = vsub.f32 %v23, %v35
  %v38 = vsub.f32 %v24, %v36
  %v39 = vmul.f32 %v37, %v37
  %v40 = vmul.f32 %v38, %v38
  %v41 = vsel %vm27, %v39, 0.0
  %42 = vadd.xlane.f32.xlu0 %v41
  %v43 = vpop.xlane.xlu0 %42
  %v44 = vsel %vm27, %v40, 0.0
  %45 = vadd.xlane.f32.xlu0 %v44
  %v46 = vpop.xlane.xlu0 %45
  %v47 = vmul.f32 %v43, %v34
  %v48 = vmul.f32 %v46, %v34
  %v49 = vadd.f32 %v47, 1e-05
  %v50 = vadd.f32 %v48, 1e-05
  %v51 = vrsqrt.pop %v49
  %v52 = vrsqrt.pop %v50
  %v53 = vmul.f32 %v37, %v51
  %v54 = vmul.f32 %v38, %v52
  %v56 = vlaneseq
  %v57 = vshrl.u32 %v56, 7
  %v58 = vsub.s32 0, %v57
  %v59 = vrot.slane %v25, %v58
  %v61 = vmul.f32 %v53, %v59
  %v62 = vmul.f32 %v54, %v59
  %v64 = vlaneseq
  %v65 = vshrl.u32 %v64, 7
  %v66 = vsub.s32 0, %v65
  %v67 = vrot.slane %v26, %v66
  %v69 = vadd.f32 %v61, %v67
  %v70 = vadd.f32 %v62, %v67
  %v71 = vpack.c.bf16 %v70, %v69
  %v72 = vld [vmem:[%s3] sm:$0xf]
  %v73 = vld [vmem:[%s3 + $0x4] sm:$0xf]
  %v74 = vld [vmem:[%s3 + $0x8] sm:$0xf]
  %v75 = vld [vmem:[%s3 + $0xc] sm:$0xf]
  %v76 = vld [vmem:[%s4] sm:$0x1]
  %v78 = vlaneseq
  %v79 = vshrl.u32 %v78, 7
  %v80 = vsub.s32 0, %v79
  %v81 = vrot.slane %v76, %v80
  %v87 = vunpack.c.l.b16 %v72
  %v88 = vunpack.c.l.b16 %v73
  %v89 = vunpack.c.l.b16 %v74
  %v90 = vunpack.c.l.b16 %v75
  %v91 = vpack.c.b16 %v88, %v87
  %v92 = vpack.c.b16 %v90, %v89
  %v96 = vsel %vm27, %v71, 0
  %98 = vmatprep.subr.bf16.mxu0 0
  %99 = vmatpush1.bf16.msra.mxu0 %v91
  %100 = vmatprep.subr.bf16.mxu0 0
  %101 = vmatpush1.bf16.msra.mxu0 %v92
  %102 = vmatprep.subr.bf16.mxu0 0
  %103 = vmatpush1.bf16.msra.mxu0 0
  %104 = vmatprep.subr.bf16.mxu0 0
  %105 = vmatpush1.bf16.msra.mxu0 0
  %106 = vmatprep.subr.bf16.mxu0 0
  %107 = vmatpush1.bf16.msra.mxu0 0
  %108 = vmatprep.subr.bf16.mxu0 0
  %109 = vmatpush1.bf16.msra.mxu0 0
  %110 = vmatprep.subr.bf16.mxu0 0
  %111 = vmatpush1.bf16.msra.mxu0 0
  %112 = vmatprep.subr.bf16.mxu0 0
  %113 = vmatpush1.bf16.msra.mxu0 0
  %114 = vmatprep.subr.bf16.mxu0 0
  %115 = vmatpush1.bf16.msra.mxu0 0
  %116 = vmatprep.subr.bf16.mxu0 0
  %117 = vmatpush1.bf16.msra.mxu0 0
  %118 = vmatprep.subr.bf16.mxu0 0
  %119 = vmatpush1.bf16.msra.mxu0 0
  %120 = vmatprep.subr.bf16.mxu0 0
  %121 = vmatpush1.bf16.msra.mxu0 0
  %122 = vmatprep.subr.bf16.mxu0 0
  %123 = vmatpush1.bf16.msra.mxu0 0
  %124 = vmatprep.subr.bf16.mxu0 0
  %125 = vmatpush1.bf16.msra.mxu0 0
  %126 = vmatprep.subr.bf16.mxu0 0
  %127 = vmatpush1.bf16.msra.mxu0 0
  %128 = vmatprep.subr.bf16.mxu0 0
  %129 = vmatpush1.bf16.msra.mxu0 0
  %130 = vmatprep.mubr.bf16.mxu0 0
  %131 = vmatmul.mubr.bf16.gmra.mrb[0].mxu0 %v96
  %v132 = vpop.f32.mrb[0].mxu0
  %v133 = vadd.f32 %v81, %v132
  %v134 = vpop.f32.mrb[0].mxu0
  %v135 = vpop.f32.mrb[0].mxu0
  %v136 = vadd.f32 %v81, %v135
  %v137 = vpop.f32.mrb[0].mxu0
  %138 = vdwg.mxu0
  %v139 = vmul.f32 %v133, %v133
  %v140 = vmul.f32 %v136, %v136
  %v141 = vmul.f32 %v133, %v139
  %v142 = vmul.f32 %v136, %v140
  %v143 = vmul.f32 %v141, 0.044715
  %v144 = vmul.f32 %v142, 0.044715
  %v145 = vadd.f32 %v133, %v143
  %v146 = vadd.f32 %v136, %v144
  %v147 = vmul.f32 %v145, 0.7978846
  %v148 = vmul.f32 %v146, 0.7978846
  %v149 = vtanh.pop %v147
  %v150 = vtanh.pop %v148
  %v151 = vadd.f32 %v149, 1.0
  %v152 = vadd.f32 %v150, 1.0
  %v153 = vmul.f32 %v151, 0.5
  %v154 = vmul.f32 %v152, 0.5
  %v155 = vmul.f32 %v133, %v153
  %v156 = vmul.f32 %v136, %v154
  %v157 = vpack.c.bf16 %v156, %v155
  %v159 = vunpack.c.l.b16 %v157
  %v160 = vunpack.c.h.b16 %v157
  %v161 = vpack.c.b16 %v159, %v159
  %v162 = vpack.c.b16 %v160, %v160
  %165 = vst [vmem:[%s5] sm:$0xf] %v161
  %166 = vst [vmem:[%s5 + $0x4] sm:$0xf] %v162
  // Predicated region
  $region22: #{gpt2_word_encoder_forward.14} parent=0 // pred_check
    _
  $region23: #{gpt2_word_encoder_forward.14} parent=0 // pred_check_branch
    %168 = sbr.rel (0) target = $region25
  $region24: #{gpt2_word_encoder_forward.14} parent=0 // pred_region
    _
  $region25: #{gpt2_word_encoder_forward.14} parent=0 // pred_fallthru
    _
  // Predicated region
  $region26: #{gpt2_word_encoder_forward.14} parent=0 // pred_check
    _
  $region27: #{gpt2_word_encoder_forward.14} parent=0 // pred_check_branch
    %170 = sbr.rel (0) target = $region29
  $region28: #{gpt2_word_encoder_forward.14} parent=0 // pred_region
    _
  $region29: #{gpt2_word_encoder_forward.14} parent=0 // pred_fallthru
    _

// kernel: gpt2_word_encoder_forward.12
$region0: #{gpt2_word_encoder_forward.12}
  #allocation0 [shape = 'u32[]', space=smem, size = 0x4, offset = 0x4, fixed_abs, tag = 'smem constant byte address 0x4 - core index']
  #allocation1 [shape = 'u32[144,128]{1,0:T(1,128)}', space=vmem, size = 0x12000, scoped, tag = 'internal scratch']
  %s0 = inlined_call_operand.vmem [shape: bf16[2,8,32], index: 0, kind: input, shape index: {}]
  %s1 = inlined_call_operand.vmem [shape: bf16[2,8,32], index: 1, kind: input, shape index: {}]
  %s2 = inlined_call_operand.vmem [shape: bf16[2,8,32], index: 2, kind: input, shape index: {}]
  %s3 = inlined_call_operand.vmem [shape: f32[2,1,8], index: 3, kind: input, shape index: {}]
  %s4 = inlined_call_operand.vmem [shape: bf16[2,8,32], index: 4, kind: output, shape index: {}]
  %s5 = sld [smem:[#allocation0]]
  $region49: #{gpt2_word_encoder_forward.12} parent=0
    _
  %s7 = ssub.s32 1, %s5
  %s8 = scalar_select 0, %s7, %s5
  loop: start=0, step=1, limit=4
  $region2: #{gpt2_word_encoder_forward.12} parent=0 // loop_pre_header
    _
  $region3: #{gpt2_word_encoder_forward.12} parent=0 // loop_header
    %s10 = sphi 0, %s14
    %p11 = scmp.ge.s32.totalorder %s10, 4
    %s17 = sphi 0, %s29
    %s18 = sphi 0, %s25
    %s19 = sphi 0, %s17
    %s20 = sphi 0, %s18
    %s21 = sphi 0, %s19
    %s22 = sphi 0, %s20
    %s34 = sphi 0, %s36
    %s37 = sphi 0, %s34
    %s38 = sphi 0, %s37
    %s54 = sphi 0, %s38
    %s62 = sphi 0, %s64
    %s65 = sphi 0, %s62
    %s66 = sphi 0, %s65
    %s82 = sphi 0, %s66
    %s90 = sphi 0, %s92
    %s93 = sphi 0, %s90
    %s94 = sphi 0, %s93
    %s110 = sphi 0, %s94
    %s116 = sphi 0, %s118
    %s119 = sphi 0, %s116
    %s120 = sphi 0, %s119
    %s136 = sphi 0, %s120
    %s144 = sphi 0, %s146
    %s147 = sphi 0, %s144
    %s148 = sphi 0, %s147
    %s164 = sphi 0, %s148
  $region4: #{gpt2_word_encoder_forward.12} parent=0 // loop_header_branch
    %13 = sbr.rel (%p11) target = $region8
  $region5: #{gpt2_word_encoder_forward.12} parent=0 // loop_body
    %s15 = ssub.s32 %s10, 1
    %s16 = ssub.s32 %s10, 2
    %s23 = sadd.s32 1, %s18
    %p24 = scmp.ge.s32.totalorder %s23, 1
    %s25 = scalar_select %p24, 0, %s23
    %s26 = sadd.s32 1, %s17
    %s27 = scalar_select %p24, %s26, %s17
    %p28 = scmp.ge.s32.totalorder %s27, 2
    %s29 = scalar_select %p28, 0, %s27
    %s30 = ssub.s32 %s17, %s29
    %s31 = ssub.s32 %s18, %s25
    %s32 = sor.u32 %s30, %s31
    %p33 = scmp.eq.s32.totalorder %s32, 0
    %s35 = sadd.s32 %s34, 1
    %s36 = scalar_select %p33, %s34, %s35
    %p39 = pneg %p33
    %p40 = scmp.eq.s32.totalorder %s10, 1
    %p41 = por %p39, %p40
    %p42 = scmp.ne.s32.totalorder %s34, %s37
    %p43 = scmp.eq.s32.totalorder %s10, 0
    %p44 = por %p42, %p43
    %p45 = scmp.ne.s32.totalorder %s34, %s37
    %p46 = scmp.eq.s32.totalorder %s15, 1
    %p47 = por %p45, %p46
    %p48 = scmp.ne.s32.totalorder %s37, %s38
    %p49 = scmp.eq.s32.totalorder %s15, 0
    %p50 = por %p48, %p49
    %p51 = scmp.ne.s32.totalorder %s37, %s38
    %p52 = scmp.eq.s32.totalorder %s16, 1
    %p53 = por %p51, %p52
    %p55 = scmp.ne.s32.totalorder %s38, %s54
    %p56 = scmp.eq.s32.totalorder %s16, 0
    %p57 = por %p55, %p56
    %s58 = ssub.s32 %s17, %s29
    %s59 = ssub.s32 %s18, %s25
    %s60 = sor.u32 %s58, %s59
    %p61 = scmp.eq.s32.totalorder %s60, 0
    %s63 = sadd.s32 %s62, 1
    %s64 = scalar_select %p61, %s62, %s63
    %p67 = pneg %p61
    %p68 = scmp.eq.s32.totalorder %s10, 1
    %p69 = por %p67, %p68
    %p70 = scmp.ne.s32.totalorder %s62, %s65
    %p71 = scmp.eq.s32.totalorder %s10, 0
    %p72 = por %p70, %p71
    %p73 = scmp.ne.s32.totalorder %s62, %s65
    %p74 = scmp.eq.s32.totalorder %s15, 1
    %p75 = por %p73, %p74
    %p76 = scmp.ne.s32.totalorder %s65, %s66
    %p77 = scmp.eq.s32.totalorder %s15, 0
    %p78 = por %p76, %p77
    %p79 = scmp.ne.s32.totalorder %s65, %s66
    %p80 = scmp.eq.s32.totalorder %s16, 1
    %p81 = por %p79, %p80
    %p83 = scmp.ne.s32.totalorder %s66, %s82
    %p84 = scmp.eq.s32.totalorder %s16, 0
    %p85 = por %p83, %p84
    %s86 = ssub.s32 %s17, %s29
    %s87 = ssub.s32 %s18, %s25
    %s88 = sor.u32 %s86, %s87
    %p89 = scmp.eq.s32.totalorder %s88, 0
    %s91 = sadd.s32 %s90, 1
    %s92 = scalar_select %p89, %s90, %s91
    %p95 = pneg %p89
    %p96 = scmp.eq.s32.totalorder %s10, 1
    %p97 = por %p95, %p96
    %p98 = scmp.ne.s32.totalorder %s90, %s93
    %p99 = scmp.eq.s32.totalorder %s10, 0
    %p100 = por %p98, %p99
    %p101 = scmp.ne.s32.totalorder %s90, %s93
    %p102 = scmp.eq.s32.totalorder %s15, 1
    %p103 = por %p101, %p102
    %p104 = scmp.ne.s32.totalorder %s93, %s94
    %p105 = scmp.eq.s32.totalorder %s15, 0
    %p106 = por %p104, %p105
    %p107 = scmp.ne.s32.totalorder %s93, %s94
    %p108 = scmp.eq.s32.totalorder %s16, 1
    %p109 = por %p107, %p108
    %p111 = scmp.ne.s32.totalorder %s94, %s110
    %p112 = scmp.eq.s32.totalorder %s16, 0
    %p113 = por %p111, %p112
    %s114 = ssub.s32 %s17, %s29
    %p115 = scmp.eq.s32.totalorder %s114, 0
    %s117 = sadd.s32 %s116, 1
    %s118 = scalar_select %p115, %s116, %s117
    %p121 = pneg %p115
    %p122 = scmp.eq.s32.totalorder %s10, 1
    %p123 = por %p121, %p122
    %p124 = scmp.ne.s32.totalorder %s116, %s119
    %p125 = scmp.eq.s32.totalorder %s10, 0
    %p126 = por %p124, %p125
    %p127 = scmp.ne.s32.totalorder %s116, %s119
    %p128 = scmp.eq.s32.totalorder %s15, 1
    %p129 = por %p127, %p128
    %p130 = scmp.ne.s32.totalorder %s119, %s120
    %p131 = scmp.eq.s32.totalorder %s15, 0
    %p132 = por %p130, %p131
    %p133 = scmp.ne.s32.totalorder %s119, %s120
    %p134 = scmp.eq.s32.totalorder %s16, 1
    %p135 = por %p133, %p134
    %p137 = scmp.ne.s32.totalorder %s120, %s136
    %p138 = scmp.eq.s32.totalorder %s16, 0
    %p139 = por %p137, %p138
    %s140 = ssub.s32 %s17, %s29
    %s141 = ssub.s32 %s18, %s25
    %s142 = sor.u32 %s140, %s141
    %p143 = scmp.eq.s32.totalorder %s142, 0
    %s145 = sadd.s32 %s144, 1
    %s146 = scalar_select %p143, %s144, %s145
    %p149 = pneg %p143
    %p150 = scmp.eq.s32.totalorder %s10, 1
    %p151 = por %p149, %p150
    %p152 = scmp.ne.s32.totalorder %s144, %s147
    %p153 = scmp.eq.s32.totalorder %s10, 0
    %p154 = por %p152, %p153
    %p155 = scmp.ne.s32.totalorder %s144, %s147
    %p156 = scmp.eq.s32.totalorder %s15, 1
    %p157 = por %p155, %p156
    %p158 = scmp.ne.s32.totalorder %s147, %s148
    %p159 = scmp.eq.s32.totalorder %s15, 0
    %p160 = por %p158, %p159
    %p161 = scmp.ne.s32.totalorder %s147, %s148
    %p162 = scmp.eq.s32.totalorder %s16, 1
    %p163 = por %p161, %p162
    %p165 = scmp.ne.s32.totalorder %s148, %s164
    %p166 = scmp.eq.s32.totalorder %s16, 0
    %p167 = por %p165, %p166
    %p168 = scmp.le.s32.totalorder 1, %s10
    %p169 = scmp.lt.s32.totalorder %s10, 3
    %p170 = pnand %p168, %p169
    %p171 = pneg %p170
    // Predicated region
    $region9: #{gpt2_word_encoder_forward.12} parent=5 // pred_check
      _
    $region10: #{gpt2_word_encoder_forward.12} parent=5 // pred_check_branch
      %173 = sbr.rel (%p170) target = $region12
    $region11: #{gpt2_word_encoder_forward.12} parent=5 // pred_region
      %s174 = ssub.s32 %s10, 1
    $region12: #{gpt2_word_encoder_forward.12} parent=5 // pred_fallthru
      _
    %p175 = scmp.lt.s32.totalorder %s10, 2
    // Predicated region
    $region13: #{gpt2_word_encoder_forward.12} parent=5 // pred_check
      %p176 = pneg %p175
    $region14: #{gpt2_word_encoder_forward.12} parent=5 // pred_check_branch
      %178 = sbr.rel (%p176) target = $region16
    $region15: #{gpt2_word_encoder_forward.12} parent=5 // pred_region
      // Predicated region
      $region17: #{gpt2_word_encoder_forward.12} parent=15 // pred_check
        %p179 = pneg %p44
      $region18: #{gpt2_word_encoder_forward.12} parent=15 // pred_check_branch
        %181 = sbr.rel (%p179) target = $region20
      $region19: #{gpt2_word_encoder_forward.12} parent=15 // pred_region
        %p182 = scmp.lt.s32.totalorder %s17, 1
        %s183 = scalar_select %p182, %s17, 1
        %p184 = scmp.lt.s32.totalorder %s18, 0
        %s185 = scalar_select %p184, %s18, 0
        %s186 = sadd.s32 %s185, %s183
        %s187 = smul.addr %s186, 4
        %s188 = scalar_lea.vmem %s0, %s187
      $region20: #{gpt2_word_encoder_forward.12} parent=15 // pred_fallthru
        _
      // Predicated region
      $region21: #{gpt2_word_encoder_forward.12} parent=15 // pred_check
        %p189 = pneg %p72
      $region22: #{gpt2_word_encoder_forward.12} parent=15 // pred_check_branch
        %191 = sbr.rel (%p189) target = $region24
      $region23: #{gpt2_word_encoder_forward.12} parent=15 // pred_region
        %p192 = scmp.lt.s32.totalorder %s17, 1
        %s193 = scalar_select %p192, %s17, 1
        %p194 = scmp.lt.s32.totalorder %s18, 0
        %s195 = scalar_select %p194, %s18, 0
        %s196 = sadd.s32 %s195, %s193
        %s197 = smul.addr %s196, 4
        %s198 = scalar_lea.vmem %s1, %s197
      $region24: #{gpt2_word_encoder_forward.12} parent=15 // pred_fallthru
        _
      // Predicated region
      $region25: #{gpt2_word_encoder_forward.12} parent=15 // pred_check
        %p199 = pneg %p100
      $region26: #{gpt2_word_encoder_forward.12} parent=15 // pred_check_branch
        %201 = sbr.rel (%p199) target = $region28
      $region27: #{gpt2_word_encoder_forward.12} parent=15 // pred_region
        %p202 = scmp.lt.s32.totalorder %s17, 1
        %s203 = scalar_select %p202, %s17, 1
        %p204 = scmp.lt.s32.totalorder %s18, 0
        %s205 = scalar_select %p204, %s18, 0
        %s206 = sadd.s32 %s205, %s203
        %s207 = smul.addr %s206, 4
        %s208 = scalar_lea.vmem %s2, %s207
      $region28: #{gpt2_word_encoder_forward.12} parent=15 // pred_fallthru
        _
      // Predicated region
      $region29: #{gpt2_word_encoder_forward.12} parent=15 // pred_check
        %p209 = pneg %p126
      $region30: #{gpt2_word_encoder_forward.12} parent=15 // pred_check_branch
        %211 = sbr.rel (%p209) target = $region32
      $region31: #{gpt2_word_encoder_forward.12} parent=15 // pred_region
        %p212 = scmp.lt.s32.totalorder %s17, 1
        %s213 = scalar_select %p212, %s17, 1
        %s214 = scalar_lea.vmem %s3, %s213
      $region32: #{gpt2_word_encoder_forward.12} parent=15 // pred_fallthru
        _
    $region16: #{gpt2_word_encoder_forward.12} parent=5 // pred_fallthru
      _
    %p215 = scmp.le.s32.totalorder 1, %s10
    %p216 = scmp.lt.s32.totalorder %s10, 3
    %p217 = pnand %p215, %p216
    %p218 = pneg %p217
    // Predicated region
    $region33: #{gpt2_word_encoder_forward.12} parent=5 // pred_check
      _
    $region34: #{gpt2_word_encoder_forward.12} parent=5 // pred_check_branch
      %220 = sbr.rel (%p217) target = $region36
    $region35: #{gpt2_word_encoder_forward.12} parent=5 // pred_region
      %s221 = ssub.s32 %s10, 1
      %p222 = scmp.lt.s32.totalorder %s19, 1
      %s223 = scalar_select %p222, %s19, 1
      %p224 = scmp.lt.s32.totalorder %s20, 0
      %s225 = scalar_select %p224, %s20, 0
      %s226 = sadd.s32 %s225, %s223
      %s227 = smul.addr %s226, 4
      %s228 = scalar_lea.vmem %s0, %s227
      %p229 = pneg %p50
      %p230 = pneg %p47
      %p231 = scmp.lt.s32.totalorder %s19, 1
      %s232 = scalar_select %p231, %s19, 1
      %p233 = scmp.lt.s32.totalorder %s20, 0
      %s234 = scalar_select %p233, %s20, 0
      %s235 = sadd.s32 %s234, %s232
      %s236 = smul.addr %s235, 4
      %s237 = scalar_lea.vmem %s1, %s236
      %p238 = pneg %p78
      %p239 = pneg %p75
      %p240 = scmp.lt.s32.totalorder %s19, 1
      %s241 = scalar_select %p240, %s19, 1
      %p242 = scmp.lt.s32.totalorder %s20, 0
      %s243 = scalar_select %p242, %s20, 0
      %s244 = sadd.s32 %s243, %s241
      %s245 = smul.addr %s244, 4
      %s246 = scalar_lea.vmem %s2, %s245
      %p247 = pneg %p106
      %p248 = pneg %p103
      %p249 = scmp.lt.s32.totalorder %s19, 1
      %s250 = scalar_select %p249, %s19, 1
      %s251 = scalar_lea.vmem %s3, %s250
      %p252 = pneg %p132
      %p253 = pneg %p129
      %p254 = pneg %p160
      %p255 = pneg %p157
      %p256 = scmp.lt.s32.totalorder %s19, 1
      %s257 = scalar_select %p256, %s19, 1
      %p258 = scmp.lt.s32.totalorder %s20, 0
      %s259 = scalar_select %p258, %s20, 0
      %s260 = sadd.s32 %s259, %s257
      %s261 = smul.addr %s260, 4
      %s262 = scalar_lea.vmem %s4, %s261
      %p263 = scmp.lt.s32.totalorder %s19, 1
      %s264 = scalar_select %p263, %s19, 1
      %p265 = scmp.lt.s32.totalorder %s20, 0
      %s266 = scalar_select %p265, %s20, 0
      %s267 = sadd.s32 %s266, %s264
      %s268 = smul.addr %s267, 4
      %s269 = scalar_lea.vmem %s0, %s268
      %p270 = scmp.lt.s32.totalorder %s19, 1
      %s271 = scalar_select %p270, %s19, 1
      %p272 = scmp.lt.s32.totalorder %s20, 0
      %s273 = scalar_select %p272, %s20, 0
      %s274 = sadd.s32 %s273, %s271
      %s275 = smul.addr %s274, 4
      %s276 = scalar_lea.vmem %s1, %s275
      %p277 = scmp.lt.s32.totalorder %s19, 1
      %s278 = scalar_select %p277, %s19, 1
      %p279 = scmp.lt.s32.totalorder %s20, 0
      %s280 = scalar_select %p279, %s20, 0
      %s281 = sadd.s32 %s280, %s278
      %s282 = smul.addr %s281, 4
      %s283 = scalar_lea.vmem %s2, %s282
      %p284 = scmp.lt.s32.totalorder %s19, 1
      %s285 = scalar_select %p284, %s19, 1
      %s286 = scalar_lea.vmem %s3, %s285
      %p287 = scmp.lt.s32.totalorder %s19, 1
      %s288 = scalar_select %p287, %s19, 1
      %p289 = scmp.lt.s32.totalorder %s20, 0
      %s290 = scalar_select %p289, %s20, 0
      %s291 = sadd.s32 %s290, %s288
      %s292 = smul.addr %s291, 4
      %s293 = scalar_lea.vmem %s4, %s292
      %v295 = vlaneseq
      %v296 = vshrl.u32 %v295, 7
      %v297 = vlaneseq
      %v298 = vand.u32 %v297, 127
      %vm299 = vcmp.le.s32.totalorder %v298, %v296
      %v300 = vsel %vm299, 0.0, -1e+09
      %v301 = vld [vmem:[%s286] sm:$0x1]
      %v303 = vlaneseq
      %v304 = vshrl.u32 %v303, 7
      %v305 = vsub.s32 0, %v304
      %v306 = vrot.slane %v301, %v305
      %v308 = vadd.f32 %v300, %v306
      %v309 = vld [vmem:[%s269] sm:$0xf]
      %v310 = vld [vmem:[%s276] sm:$0xf]
      %v311 = vld [vmem:[%s283] sm:$0xf]
      %vm312 = vcmask 130048
      %v314 = vsel %vm312, %v309, 0
      %v317 = vsel %vm312, %v310, 0
      %319 = vmatprep.subr.bf16.mxu0 0
      %320 = vmatpush1.bf16.xpose.msra.mxu0 %v317
      %321 = vmatprep.subr.bf16.mxu0 0
      %322 = vmatpush1.bf16.xpose.msra.mxu0 0
      %323 = vmatprep.subr.bf16.mxu0 0
      %324 = vmatpush1.bf16.xpose.msra.mxu0 0
      %325 = vmatprep.subr.bf16.mxu0 0
      %326 = vmatpush1.bf16.xpose.msra.mxu0 0
      %327 = vmatprep.subr.bf16.mxu0 0
      %328 = vmatpush1.bf16.xpose.msra.mxu0 0
      %329 = vmatprep.subr.bf16.mxu0 0
      %330 = vmatpush1.bf16.xpose.msra.mxu0 0
      %331 = vmatprep.subr.bf16.mxu0 0
      %332 = vmatpush1.bf16.xpose.msra.mxu0 0
      %333 = vmatprep.subr.bf16.mxu0 0
      %334 = vmatpush1.bf16.xpose.msra.mxu0 0
      %335 = vmatprep.subr.bf16.mxu0 0
      %336 = vmatpush1.bf16.xpose.msra.mxu0 0
      %337 = vmatprep.subr.bf16.mxu0 0
      %338 = vmatpush1.bf16.xpose.msra.mxu0 0
      %339 = vmatprep.subr.bf16.mxu0 0
      %340 = vmatpush1.bf16.xpose.msra.mxu0 0
      %341 = vmatprep.subr.bf16.mxu0 0
      %342 = vmatpush1.bf16.xpose.msra.mxu0 0
      %343 = vmatprep.subr.bf16.mxu0 0
      %344 = vmatpush1.bf16.xpose.msra.mxu0 0
      %345 = vmatprep.subr.bf16.mxu0 0
      %346 = vmatpush1.bf16.xpose.msra.mxu0 0
      %347 = vmatprep.subr.bf16.mxu0 0
      %348 = vmatpush1.bf16.xpose.msra.mxu0 0
      %349 = vmatprep.subr.bf16.mxu0 0
      %350 = vmatpush1.bf16.xpose.msra.mxu0 0
      %351 = vmatprep.mubr.bf16.mxu0 0
      %352 = vmatmul.mubr.bf16.gmra.mrb[0].mxu0 %v314
      %v353 = vpop.f32.mrb[0].mxu0
      %v354 = vadd.f32 0.0, %v353
      %v355 = vpop.f32.mrb[0].mxu0
      %v356 = vpop.f32.mrb[0].mxu0
      %v357 = vpop.f32.mrb[0].mxu0
      %358 = vdwg.mxu0
      %v359 = vmul.f32 %v354, 0.25
      %v360 = vadd.f32 %v359, %v308
      %vm361 = vcmask 64512
      %v362 = vsel %vm361, %v360, -inf
      %363 = vmax.xlane.f32.xlu0 %v362
      %v364 = vpop.xlane.xlu0 %363
      %v365 = vsub.f32 %v360, %v364
      %v366 = vmul.f32 %v365, 1.442695
      %v367 = vpow.pop %v366
      %v368 = vsel %vm361, %v367, 0.0
      %369 = vadd.xlane.f32.xlu0 %v368
      %v370 = vpop.xlane.xlu0 %369
      %v371 = vrcp.pop %v370
      %v372 = vmul.f32 %v367, %v371
      %v373 = vpack.c.bf16 %v372, %v372
      %v375 = vsel %vm361, %v373, 0
      %vm377 = vcmask 1043456
      %v379 = vsel %vm377, %v311, 0
      %381 = vmatprep.subr.bf16.mxu0 0
      %382 = vmatpush1.bf16.msra.mxu0 %v379
      %383 = vmatprep.subr.bf16.mxu0 0
      %384 = vmatpush1.bf16.msra.mxu0 0
      %385 = vmatprep.subr.bf16.mxu0 0
      %386 = vmatpush1.bf16.msra.mxu0 0
      %387 = vmatprep.subr.bf16.mxu0 0
      %388 = vmatpush1.bf16.msra.mxu0 0
      %389 = vmatprep.subr.bf16.mxu0 0
      %390 = vmatpush1.bf16.msra.mxu0 0
      %391 = vmatprep.subr.bf16.mxu0 0
      %392 = vmatpush1.bf16.msra.mxu0 0
      %393 = vmatprep.subr.bf16.mxu0 0
      %394 = vmatpush1.bf16.msra.mxu0 0
      %395 = vmatprep.subr.bf16.mxu0 0
      %396 = vmatpush1.bf16.msra.mxu0 0
      %397 = vmatprep.subr.bf16.mxu0 0
      %398 = vmatpush1.bf16.msra.mxu0 0
      %399 = vmatprep.subr.bf16.mxu0 0
      %400 = vmatpush1.bf16.msra.mxu0 0
      %401 = vmatprep.subr.bf16.mxu0 0
      %402 = vmatpush1.bf16.msra.mxu0 0
      %403 = vmatprep.subr.bf16.mxu0 0
      %404 = vmatpush1.bf16.msra.mxu0 0
      %405 = vmatprep.subr.bf16.mxu0 0
      %406 = vmatpush1.bf16.msra.mxu0 0
      %407 = vmatprep.subr.bf16.mxu0 0
      %408 = vmatpush1.bf16.msra.mxu0 0
      %409 = vmatprep.subr.bf16.mxu0 0
      %410 = vmatpush1.bf16.msra.mxu0 0
      %411 = vmatprep.subr.bf16.mxu0 0
      %412 = vmatpush1.bf16.msra.mxu0 0
      %413 = vmatprep.mubr.bf16.mxu0 0
      %414 = vmatmul.mubr.bf16.gmra.mrb[0].mxu0 %v375
      %v415 = vpop.f32.mrb[0].mxu0
      %v416 = vadd.f32 0.0, %v415
      %v417 = vpop.f32.mrb[0].mxu0
      %v418 = vpop.f32.mrb[0].mxu0
      %v419 = vpop.f32.mrb[0].mxu0
      %420 = vdwg.mxu0
      %v421 = vld [vmem:[%s269] sm:$0xf]
      %v422 = vld [vmem:[%s276] sm:$0xf]
      %v423 = vld [vmem:[%s283] sm:$0xf]
      %v425 = vunpack.c.l.b16 %v421
      %v426 = vpack.c.b16 %v425, %v425
      %427 = vrot.lane.b32.xlu0 %v426, 112
      %v428 = vpop.permute.xlu0 %427
      %v430 = vunpack.c.l.b16 %v422
      %v431 = vpack.c.b16 %v430, %v430
      %432 = vrot.lane.b32.xlu0 %v431, 112
      %v433 = vpop.permute.xlu0 %432
      %v435 = vsel %vm312, %v428, 0
      %v438 = vsel %vm312, %v433, 0
      %440 = vmatprep.subr.bf16.mxu0 0
      %441 = vmatpush1.bf16.xpose.msra.mxu0 %v438
      %442 = vmatprep.subr.bf16.mxu0 0
      %443 = vmatpush1.bf16.xpose.msra.mxu0 0
      %444 = vmatprep.subr.bf16.mxu0 0
      %445 = vmatpush1.bf16.xpose.msra.mxu0 0
      %446 = vmatprep.subr.bf16.mxu0 0
      %447 = vmatpush1.bf16.xpose.msra.mxu0 0
      %448 = vmatprep.subr.bf16.mxu0 0
      %449 = vmatpush1.bf16.xpose.msra.mxu0 0
      %450 = vmatprep.subr.bf16.mxu0 0
      %451 = vmatpush1.bf16.xpose.msra.mxu0 0
      %452 = vmatprep.subr.bf16.mxu0 0
      %453 = vmatpush1.bf16.xpose.msra.mxu0 0
      %454 = vmatprep.subr.bf16.mxu0 0
      %455 = vmatpush1.bf16.xpose.msra.mxu0 0
      %456 = vmatprep.subr.bf16.mxu0 0
      %457 = vmatpush1.bf16.xpose.msra.mxu0 0
      %458 = vmatprep.subr.bf16.mxu0 0
      %459 = vmatpush1.bf16.xpose.msra.mxu0 0
      %460 = vmatprep.subr.bf16.mxu0 0
      %461 = vmatpush1.bf16.xpose.msra.mxu0 0
      %462 = vmatprep.subr.bf16.mxu0 0
      %463 = vmatpush1.bf16.xpose.msra.mxu0 0
      %464 = vmatprep.subr.bf16.mxu0 0
      %465 = vmatpush1.bf16.xpose.msra.mxu0 0
      %466 = vmatprep.subr.bf16.mxu0 0
      %467 = vmatpush1.bf16.xpose.msra.mxu0 0
      %468 = vmatprep.subr.bf16.mxu0 0
      %469 = vmatpush1.bf16.xpose.msra.mxu0 0
      %470 = vmatprep.subr.bf16.mxu0 0
      %471 = vmatpush1.bf16.xpose.msra.mxu0 0
      %472 = vmatprep.mubr.bf16.mxu0 0
      %473 = vmatmul.mubr.bf16.gmra.mrb[0].mxu0 %v435
      %v474 = vpop.f32.mrb[0].mxu0
      %v475 = vadd.f32 0.0, %v474
      %v476 = vpop.f32.mrb[0].mxu0
      %v477 = vpop.f32.mrb[0].mxu0
      %v478 = vpop.f32.mrb[0].mxu0
      %479 = vdwg.mxu0
      %v480 = vmul.f32 %v475, 0.25
      %v481 = vadd.f32 %v480, %v308
      %v482 = vsel %vm361, %v481, -inf
      %483 = vmax.xlane.f32.xlu0 %v482
      %v484 = vpop.xlane.xlu0 %483
      %v485 = vsub.f32 %v481, %v484
      %v486 = vmul.f32 %v485, 1.442695
      %v487 = vpow.pop %v486
      %v488 = vsel %vm361, %v487, 0.0
      %489 = vadd.xlane.f32.xlu0 %v488
      %v490 = vpop.xlane.xlu0 %489
      %v491 = vrcp.pop %v490
      %v492 = vmul.f32 %v487, %v491
      %v493 = vpack.c.bf16 %v492, %v492
      %v495 = vunpack.c.l.b16 %v423
      %v496 = vpack.c.b16 %v495, %v495
      %497 = vrot.lane.b32.xlu0 %v496, 112
      %v498 = vpop.permute.xlu0 %497
      %v500 = vsel %vm361, %v493, 0
      %v503 = vsel %vm377, %v498, 0
      %505 = vmatprep.subr.bf16.mxu0 0
      %506 = vmatpush1.bf16.msra.mxu0 %v503
      %507 = vmatprep.subr.bf16.mxu0 0
      %508 = vmatpush1.bf16.msra.mxu0 0
      %509 = vmatprep.subr.bf16.mxu0 0
      %510 = vmatpush1.bf16.msra.mxu0 0
      %511 = vmatprep.subr.bf16.mxu0 0
      %512 = vmatpush1.bf16.msra.mxu0 0
      %513 = vmatprep.subr.bf16.mxu0 0
      %514 = vmatpush1.bf16.msra.mxu0 0
      %515 = vmatprep.subr.bf16.mxu0 0
      %516 = vmatpush1.bf16.msra.mxu0 0
      %517 = vmatprep.subr.bf16.mxu0 0
      %518 = vmatpush1.bf16.msra.mxu0 0
      %519 = vmatprep.subr.bf16.mxu0 0
      %520 = vmatpush1.bf16.msra.mxu0 0
      %521 = vmatprep.subr.bf16.mxu0 0
      %522 = vmatpush1.bf16.msra.mxu0 0
      %523 = vmatprep.subr.bf16.mxu0 0
      %524 = vmatpush1.bf16.msra.mxu0 0
      %525 = vmatprep.subr.bf16.mxu0 0
      %526 = vmatpush1.bf16.msra.mxu0 0
      %527 = vmatprep.subr.bf16.mxu0 0
      %528 = vmatpush1.bf16.msra.mxu0 0
      %529 = vmatprep.subr.bf16.mxu0 0
      %530 = vmatpush1.bf16.msra.mxu0 0
      %531 = vmatprep.subr.bf16.mxu0 0
      %532 = vmatpush1.bf16.msra.mxu0 0
      %533 = vmatprep.subr.bf16.mxu0 0
      %534 = vmatpush1.bf16.msra.mxu0 0
      %535 = vmatprep.subr.bf16.mxu0 0
      %536 = vmatpush1.bf16.msra.mxu0 0
      %537 = vmatprep.mubr.bf16.mxu0 0
      %538 = vmatmul.mubr.bf16.gmra.mrb[0].mxu0 %v500
      %v539 = vpop.f32.mrb[0].mxu0
      %v540 = vadd.f32 0.0, %v539
      %v541 = vpop.f32.mrb[0].mxu0
      %v542 = vpop.f32.mrb[0].mxu0
      %v543 = vpop.f32.mrb[0].mxu0
      %544 = vdwg.mxu0
      %546 = vrot.lane.b32.xlu0 %v540, 16
      %v547 = vpop.permute.xlu0 %546
      %v549 = vsel %vm312, %v416, %v547
      %v550 = vpack.c.bf16 %v549, %v549
      %vm551 = vcmask 257024
      %552 = vst.msk [vmem:[%s293] sm:$0xf] %vm551, %v550
      %p553 = scmp.lt.s32.totalorder %s19, 1
      %s554 = scalar_select %p553, %s19, 1
      %p555 = scmp.lt.s32.totalorder %s20, 0
      %s556 = scalar_select %p555, %s20, 0
      %s557 = sadd.s32 %s556, %s554
      %s558 = smul.addr %s557, 4
      %s559 = scalar_lea.vmem %s4, %s558
      // Predicated region
      $region37: #{gpt2_word_encoder_forward.12} parent=35 // pred_check
        %p560 = pneg %p157
      $region38: #{gpt2_word_encoder_forward.12} parent=35 // pred_check_branch
        %562 = sbr.rel (%p560) target = $region40
      $region39: #{gpt2_word_encoder_forward.12} parent=35 // pred_region
        _
      $region40: #{gpt2_word_encoder_forward.12} parent=35 // pred_fallthru
        _
    $region36: #{gpt2_word_encoder_forward.12} parent=5 // pred_fallthru
      _
    %p563 = scmp.le.s32.totalorder 2, %s10
    // Predicated region
    $region41: #{gpt2_word_encoder_forward.12} parent=5 // pred_check
      %p564 = pneg %p563
    $region42: #{gpt2_word_encoder_forward.12} parent=5 // pred_check_branch
      %566 = sbr.rel (%p564) target = $region44
    $region43: #{gpt2_word_encoder_forward.12} parent=5 // pred_region
      %s567 = ssub.s32 %s10, 2
      // Predicated region
      $region45: #{gpt2_word_encoder_forward.12} parent=43 // pred_check
        %p568 = pneg %p163
      $region46: #{gpt2_word_encoder_forward.12} parent=43 // pred_check_branch
        %570 = sbr.rel (%p568) target = $region48
      $region47: #{gpt2_word_encoder_forward.12} parent=43 // pred_region
        %p571 = scmp.lt.s32.totalorder %s21, 1
        %s572 = scalar_select %p571, %s21, 1
        %p573 = scmp.lt.s32.totalorder %s22, 0
        %s574 = scalar_select %p573, %s22, 0
        %s575 = sadd.s32 %s574, %s572
        %s576 = smul.addr %s575, 4
        %s577 = scalar_lea.vmem %s4, %s576
      $region48: #{gpt2_word_encoder_forward.12} parent=43 // pred_fallthru
        _
    $region44: #{gpt2_word_encoder_forward.12} parent=5 // pred_fallthru
      _
  $region6: #{gpt2_word_encoder_forward.12} parent=0 // loop_footer
    %s14 = sadd.s32 1, %s10
  $region7: #{gpt2_word_encoder_forward.12} parent=0 // loop_footer_branch
    %9 = sbr.rel target = $region3
  $region8: #{gpt2_word_encoder_forward.12} parent=0 // loop_exit
    _

// kernel: gpt2_word_encoder_forward.11
$region0: #{gpt2_word_encoder_forward.11}
  #allocation0 [shape = 'u32[]', space=smem, size = 0x4, offset = 0x4, fixed_abs, tag = 'smem constant byte address 0x4 - core index']
  #allocation1 [shape = 'u32[144,128]{1,0:T(1,128)}', space=vmem, size = 0x12000, scoped, tag = 'internal scratch']
  %s0 = inlined_call_operand.vmem [shape: bf16[16,32], index: 0, kind: input, shape index: {}]
  %s1 = inlined_call_operand.vmem [shape: f32[1,32], index: 1, kind: input, shape index: {}]
  %s2 = inlined_call_operand.vmem [shape: f32[1,32], index: 2, kind: input, shape index: {}]
  %s3 = inlined_call_operand.vmem [shape: bf16[32,32], index: 3, kind: input, shape index: {}]
  %s4 = inlined_call_operand.vmem [shape: bf16[32,32], index: 4, kind: input, shape index: {}]
  %s5 = inlined_call_operand.vmem [shape: bf16[32,32], index: 5, kind: input, shape index: {}]
  %s6 = inlined_call_operand.vmem [shape: f32[1,32], index: 6, kind: input, shape index: {}]
  %s7 = inlined_call_operand.vmem [shape: f32[1,32], index: 7, kind: input, shape index: {}]
  %s8 = inlined_call_operand.vmem [shape: f32[1,32], index: 8, kind: input, shape index: {}]
  %s9 = inlined_call_operand.vmem [shape: bf16[16,32], index: 9, kind: output, shape index: {0}]
  %s10 = inlined_call_operand.vmem [shape: bf16[16,32], index: 10, kind: output, shape index: {1}]
  %s11 = inlined_call_operand.vmem [shape: bf16[16,32], index: 11, kind: output, shape index: {2}]
  %12 = xla_tuple %s9, %s10, %s11
  %s13 = sld [smem:[#allocation0]]
  $region62: #{gpt2_word_encoder_forward.11} parent=0
    _
  %s15 = ssub.s32 1, %s13
  %s16 = scalar_select 0, %s15, %s13
  // Predicated region
  $region2: #{gpt2_word_encoder_forward.11} parent=0 // pred_check
    _
  $region3: #{gpt2_word_encoder_forward.11} parent=0 // pred_check_branch
    %18 = sbr.rel (0) target = $region5
  $region4: #{gpt2_word_encoder_forward.11} parent=0 // pred_region
    _
  $region5: #{gpt2_word_encoder_forward.11} parent=0 // pred_fallthru
    _
  // Predicated region
  $region6: #{gpt2_word_encoder_forward.11} parent=0 // pred_check
    _
  $region7: #{gpt2_word_encoder_forward.11} parent=0 // pred_check_branch
    %20 = sbr.rel (0) target = $region9
  $region8: #{gpt2_word_encoder_forward.11} parent=0 // pred_region
    _
  $region9: #{gpt2_word_encoder_forward.11} parent=0 // pred_fallthru
    _
  // Predicated region
  $region10: #{gpt2_word_encoder_forward.11} parent=0 // pred_check
    _
  $region11: #{gpt2_word_encoder_forward.11} parent=0 // pred_check_branch
    %22 = sbr.rel (0) target = $region13
  $region12: #{gpt2_word_encoder_forward.11} parent=0 // pred_region
    _
  $region13: #{gpt2_word_encoder_forward.11} parent=0 // pred_fallthru
    _
  // Predicated region
  $region14: #{gpt2_word_encoder_forward.11} parent=0 // pred_check
    _
  $region15: #{gpt2_word_encoder_forward.11} parent=0 // pred_check_branch
    %24 = sbr.rel (0) target = $region17
  $region16: #{gpt2_word_encoder_forward.11} parent=0 // pred_region
    _
  $region17: #{gpt2_word_encoder_forward.11} parent=0 // pred_fallthru
    _
  // Predicated region
  $region18: #{gpt2_word_encoder_forward.11} parent=0 // pred_check
    _
  $region19: #{gpt2_word_encoder_forward.11} parent=0 // pred_check_branch
    %26 = sbr.rel (0) target = $region21
  $region20: #{gpt2_word_encoder_forward.11} parent=0 // pred_region
    _
  $region21: #{gpt2_word_encoder_forward.11} parent=0 // pred_fallthru
    _
  // Predicated region
  $region22: #{gpt2_word_encoder_forward.11} parent=0 // pred_check
    _
  $region23: #{gpt2_word_encoder_forward.11} parent=0 // pred_check_branch
    %28 = sbr.rel (0) target = $region25
  $region24: #{gpt2_word_encoder_forward.11} parent=0 // pred_region
    _
  $region25: #{gpt2_word_encoder_forward.11} parent=0 // pred_fallthru
    _
  // Predicated region
  $region26: #{gpt2_word_encoder_forward.11} parent=0 // pred_check
    _
  $region27: #{gpt2_word_encoder_forward.11} parent=0 // pred_check_branch
    %30 = sbr.rel (0) target = $region29
  $region28: #{gpt2_word_encoder_forward.11} parent=0 // pred_region
    _
  $region29: #{gpt2_word_encoder_forward.11} parent=0 // pred_fallthru
    _
  // Predicated region
  $region30: #{gpt2_word_encoder_forward.11} parent=0 // pred_check
    _
  $region31: #{gpt2_word_encoder_forward.11} parent=0 // pred_check_branch
    %32 = sbr.rel (0) target = $region33
  $region32: #{gpt2_word_encoder_forward.11} parent=0 // pred_region
    _
  $region33: #{gpt2_word_encoder_forward.11} parent=0 // pred_fallthru
    _
  // Predicated region
  $region34: #{gpt2_word_encoder_forward.11} parent=0 // pred_check
    _
  $region35: #{gpt2_word_encoder_forward.11} parent=0 // pred_check_branch
    %34 = sbr.rel (0) target = $region37
  $region36: #{gpt2_word_encoder_forward.11} parent=0 // pred_region
    _
  $region37: #{gpt2_word_encoder_forward.11} parent=0 // pred_fallthru
    _
  %v36 = vld [vmem:[%s0] sm:$0xf]
  %v37 = vld [vmem:[%s0 + $0x4] sm:$0xf]
  %v38 = vunpack.c.l.bf16 %v36
  %v39 = vunpack.c.l.bf16 %v37
  %v40 = vld [vmem:[%s1] sm:$0x1]
  %v41 = vld [vmem:[%s2] sm:$0x1]
  %vm42 = vcmask 261120
  %v43 = vsel %vm42, %v38, 0.0
  %44 = vadd.xlane.f32.xlu0 %v43
  %v45 = vpop.xlane.xlu0 %44
  %v46 = vsel %vm42, %v39, 0.0
  %47 = vadd.xlane.f32.xlu0 %v46
  %v48 = vpop.xlane.xlu0 %47
  %v49 = vrcp.pop 32.0
  %v50 = vmul.f32 %v45, %v49
  %v51 = vmul.f32 %v48, %v49
  %v52 = vsub.f32 %v38, %v50
  %v53 = vsub.f32 %v39, %v51
  %v54 = vmul.f32 %v52, %v52
  %v55 = vmul.f32 %v53, %v53
  %v56 = vsel %vm42, %v54, 0.0
  %57 = vadd.xlane.f32.xlu0 %v56
  %v58 = vpop.xlane.xlu0 %57
  %v59 = vsel %vm42, %v55, 0.0
  %60 = vadd.xlane.f32.xlu0 %v59
  %v61 = vpop.xlane.xlu0 %60
  %v62 = vmul.f32 %v58, %v49
  %v63 = vmul.f32 %v61, %v49
  %v64 = vadd.f32 %v62, 1e-05
  %v65 = vadd.f32 %v63, 1e-05
  %v66 = vrsqrt.pop %v64
  %v67 = vrsqrt.pop %v65
  %v68 = vmul.f32 %v52, %v66
  %v69 = vmul.f32 %v53, %v67
  %v71 = vlaneseq
  %v72 = vshrl.u32 %v71, 7
  %v73 = vsub.s32 0, %v72
  %v74 = vrot.slane %v40, %v73
  %v76 = vmul.f32 %v68, %v74
  %v77 = vmul.f32 %v69, %v74
  %v79 = vlaneseq
  %v80 = vshrl.u32 %v79, 7
  %v81 = vsub.s32 0, %v80
  %v82 = vrot.slane %v41, %v81
  %v84 = vadd.f32 %v76, %v82
  %v85 = vadd.f32 %v77, %v82
  %v86 = vpack.c.bf16 %v85, %v84
  %v87 = vld [vmem:[%s3] sm:$0xf]
  %v88 = vld [vmem:[%s3 + $0x4] sm:$0xf]
  %v89 = vld [vmem:[%s3 + $0x8] sm:$0xf]
  %v90 = vld [vmem:[%s3 + $0xc] sm:$0xf]
  %v91 = vld [vmem:[%s6] sm:$0x1]
  %v93 = vlaneseq
  %v94 = vshrl.u32 %v93, 7
  %v95 = vsub.s32 0, %v94
  %v96 = vrot.slane %v91, %v95
  %v102 = vunpack.c.l.b16 %v87
  %v103 = vunpack.c.l.b16 %v88
  %v104 = vunpack.c.l.b16 %v89
  %v105 = vunpack.c.l.b16 %v90
  %v106 = vpack.c.b16 %v103, %v102
  %v107 = vpack.c.b16 %v105, %v104
  %v111 = vsel %vm42, %v86, 0
  %113 = vmatprep.subr.bf16.mxu0 0
  %114 = vmatpush1.bf16.msra.mxu0 %v106
  %115 = vmatprep.subr.bf16.mxu0 0
  %116 = vmatpush1.bf16.msra.mxu0 %v107
  %117 = vmatprep.subr.bf16.mxu0 0
  %118 = vmatpush1.bf16.msra.mxu0 0
  %119 = vmatprep.subr.bf16.mxu0 0
  %120 = vmatpush1.bf16.msra.mxu0 0
  %121 = vmatprep.subr.bf16.mxu0 0
  %122 = vmatpush1.bf16.msra.mxu0 0
  %123 = vmatprep.subr.bf16.mxu0 0
  %124 = vmatpush1.bf16.msra.mxu0 0
  %125 = vmatprep.subr.bf16.mxu0 0
  %126 = vmatpush1.bf16.msra.mxu0 0
  %127 = vmatprep.subr.bf16.mxu0 0
  %128 = vmatpush1.bf16.msra.mxu0 0
  %129 = vmatprep.subr.bf16.mxu0 0
  %130 = vmatpush1.bf16.msra.mxu0 0
  %131 = vmatprep.subr.bf16.mxu0 0
  %132 = vmatpush1.bf16.msra.mxu0 0
  %133 = vmatprep.subr.bf16.mxu0 0
  %134 = vmatpush1.bf16.msra.mxu0 0
  %135 = vmatprep.subr.bf16.mxu0 0
  %136 = vmatpush1.bf16.msra.mxu0 0
  %137 = vmatprep.subr.bf16.mxu0 0
  %138 = vmatpush1.bf16.msra.mxu0 0
  %139 = vmatprep.subr.bf16.mxu0 0
  %140 = vmatpush1.bf16.msra.mxu0 0
  %141 = vmatprep.subr.bf16.mxu0 0
  %142 = vmatpush1.bf16.msra.mxu0 0
  %143 = vmatprep.subr.bf16.mxu0 0
  %144 = vmatpush1.bf16.msra.mxu0 0
  %145 = vmatprep.mubr.bf16.mxu0 0
  %146 = vmatmul.mubr.bf16.gmra.mrb[0].mxu0 %v111
  %v147 = vpop.f32.mrb[0].mxu0
  %v148 = vadd.f32 %v96, %v147
  %v149 = vpop.f32.mrb[0].mxu0
  %v150 = vpop.f32.mrb[0].mxu0
  %v151 = vadd.f32 %v96, %v150
  %v152 = vpop.f32.mrb[0].mxu0
  %153 = vdwg.mxu0
  %v154 = vpack.c.bf16 %v151, %v148
  %v156 = vunpack.c.l.b16 %v154
  %v157 = vunpack.c.h.b16 %v154
  %v158 = vpack.c.b16 %v156, %v156
  %v159 = vpack.c.b16 %v157, %v157
  %vm162 = vcmask 257024
  %163 = vst.msk [vmem:[%s9] sm:$0xf] %vm162, %v158
  %164 = vst.msk [vmem:[%s9 + $0x4] sm:$0xf] %vm162, %v159
  %v165 = vld [vmem:[%s4] sm:$0xf]
  %v166 = vld [vmem:[%s4 + $0x4] sm:$0xf]
  %v167 = vld [vmem:[%s4 + $0x8] sm:$0xf]
  %v168 = vld [vmem:[%s4 + $0xc] sm:$0xf]
  %v169 = vld [vmem:[%s7] sm:$0x1]
  %v171 = vlaneseq
  %v172 = vshrl.u32 %v171, 7
  %v173 = vsub.s32 0, %v172
  %v174 = vrot.slane %v169, %v173
  %v180 = vunpack.c.l.b16 %v165
  %v181 = vunpack.c.l.b16 %v166
  %v182 = vunpack.c.l.b16 %v167
  %v183 = vunpack.c.l.b16 %v168
  %v184 = vpack.c.b16 %v181, %v180
  %v185 = vpack.c.b16 %v183, %v182
  %188 = vmatprep.subr.bf16.mxu0 0
  %189 = vmatpush1.bf16.msra.mxu0 %v184
  %190 = vmatprep.subr.bf16.mxu0 0
  %191 = vmatpush1.bf16.msra.mxu0 %v185
  %192 = vmatprep.subr.bf16.mxu0 0
  %193 = vmatpush1.bf16.msra.mxu0 0
  %194 = vmatprep.subr.bf16.mxu0 0
  %195 = vmatpush1.bf16.msra.mxu0 0
  %196 = vmatprep.subr.bf16.mxu0 0
  %197 = vmatpush1.bf16.msra.mxu0 0
  %198 = vmatprep.subr.bf16.mxu0 0
  %199 = vmatpush1.bf16.msra.mxu0 0
  %200 = vmatprep.subr.bf16.mxu0 0
  %201 = vmatpush1.bf16.msra.mxu0 0
  %202 = vmatprep.subr.bf16.mxu0 0
  %203 = vmatpush1.bf16.msra.mxu0 0
  %204 = vmatprep.subr.bf16.mxu0 0
  %205 = vmatpush1.bf16.msra.mxu0 0
  %206 = vmatprep.subr.bf16.mxu0 0
  %207 = vmatpush1.bf16.msra.mxu0 0
  %208 = vmatprep.subr.bf16.mxu0 0
  %209 = vmatpush1.bf16.msra.mxu0 0
  %210 = vmatprep.subr.bf16.mxu0 0
  %211 = vmatpush1.bf16.msra.mxu0 0
  %212 = vmatprep.subr.bf16.mxu0 0
  %213 = vmatpush1.bf16.msra.mxu0 0
  %214 = vmatprep.subr.bf16.mxu0 0
  %215 = vmatpush1.bf16.msra.mxu0 0
  %216 = vmatprep.subr.bf16.mxu0 0
  %217 = vmatpush1.bf16.msra.mxu0 0
  %218 = vmatprep.subr.bf16.mxu0 0
  %219 = vmatpush1.bf16.msra.mxu0 0
  %220 = vmatprep.mubr.bf16.mxu0 0
  %221 = vmatmul.mubr.bf16.gmra.mrb[0].mxu0 %v111
  %v222 = vpop.f32.mrb[0].mxu0
  %v223 = vadd.f32 %v174, %v222
  %v224 = vpop.f32.mrb[0].mxu0
  %v225 = vpop.f32.mrb[0].mxu0
  %v226 = vadd.f32 %v174, %v225
  %v227 = vpop.f32.mrb[0].mxu0
  %228 = vdwg.mxu0
  %v229 = vpack.c.bf16 %v226, %v223
  %v231 = vunpack.c.l.b16 %v229
  %v232 = vunpack.c.h.b16 %v229
  %v233 = vpack.c.b16 %v231, %v231
  %v234 = vpack.c.b16 %v232, %v232
  %237 = vst.msk [vmem:[%s10] sm:$0xf] %vm162, %v233
  %238 = vst.msk [vmem:[%s10 + $0x4] sm:$0xf] %vm162, %v234
  %v239 = vld [vmem:[%s5] sm:$0xf]
  %v240 = vld [vmem:[%s5 + $0x4] sm:$0xf]
  %v241 = vld [vmem:[%s5 + $0x8] sm:$0xf]
  %v242 = vld [vmem:[%s5 + $0xc] sm:$0xf]
  %v243 = vld [vmem:[%s8] sm:$0x1]
  %v245 = vlaneseq
  %v246 = vshrl.u32 %v245, 7
  %v247 = vsub.s32 0, %v246
  %v248 = vrot.slane %v243, %v247
  %v254 = vunpack.c.l.b16 %v239
  %v255 = vunpack.c.l.b16 %v240
  %v256 = vunpack.c.l.b16 %v241
  %v257 = vunpack.c.l.b16 %v242
  %v258 = vpack.c.b16 %v255, %v254
  %v259 = vpack.c.b16 %v257, %v256
  %262 = vmatprep.subr.bf16.mxu0 0
  %263 = vmatpush1.bf16.msra.mxu0 %v258
  %264 = vmatprep.subr.bf16.mxu0 0
  %265 = vmatpush1.bf16.msra.mxu0 %v259
  %266 = vmatprep.subr.bf16.mxu0 0
  %267 = vmatpush1.bf16.msra.mxu0 0
  %268 = vmatprep.subr.bf16.mxu0 0
  %269 = vmatpush1.bf16.msra.mxu0 0
  %270 = vmatprep.subr.bf16.mxu0 0
  %271 = vmatpush1.bf16.msra.mxu0 0
  %272 = vmatprep.subr.bf16.mxu0 0
  %273 = vmatpush1.bf16.msra.mxu0 0
  %274 = vmatprep.subr.bf16.mxu0 0
  %275 = vmatpush1.bf16.msra.mxu0 0
  %276 = vmatprep.subr.bf16.mxu0 0
  %277 = vmatpush1.bf16.msra.mxu0 0
  %278 = vmatprep.subr.bf16.mxu0 0
  %279 = vmatpush1.bf16.msra.mxu0 0
  %280 = vmatprep.subr.bf16.mxu0 0
  %281 = vmatpush1.bf16.msra.mxu0 0
  %282 = vmatprep.subr.bf16.mxu0 0
  %283 = vmatpush1.bf16.msra.mxu0 0
  %284 = vmatprep.subr.bf16.mxu0 0
  %285 = vmatpush1.bf16.msra.mxu0 0
  %286 = vmatprep.subr.bf16.mxu0 0
  %287 = vmatpush1.bf16.msra.mxu0 0
  %288 = vmatprep.subr.bf16.mxu0 0
  %289 = vmatpush1.bf16.msra.mxu0 0
  %290 = vmatprep.subr.bf16.mxu0 0
  %291 = vmatpush1.bf16.msra.mxu0 0
  %292 = vmatprep.subr.bf16.mxu0 0
  %293 = vmatpush1.bf16.msra.mxu0 0
  %294 = vmatprep.mubr.bf16.mxu0 0
  %295 = vmatmul.mubr.bf16.gmra.mrb[0].mxu0 %v111
  %v296 = vpop.f32.mrb[0].mxu0
  %v297 = vadd.f32 %v248, %v296
  %v298 = vpop.f32.mrb[0].mxu0
  %v299 = vpop.f32.mrb[0].mxu0
  %v300 = vadd.f32 %v248, %v299
  %v301 = vpop.f32.mrb[0].mxu0
  %302 = vdwg.mxu0
  %v303 = vpack.c.bf16 %v300, %v297
  %v305 = vunpack.c.l.b16 %v303
  %v306 = vunpack.c.h.b16 %v303
  %v307 = vpack.c.b16 %v305, %v305
  %v308 = vpack.c.b16 %v306, %v306
  %311 = vst.msk [vmem:[%s11] sm:$0xf] %vm162, %v307
  %312 = vst.msk [vmem:[%s11 + $0x4] sm:$0xf] %vm162, %v308
  // Predicated region
  $region38: #{gpt2_word_encoder_forward.11} parent=0 // pred_check
    _
  $region39: #{gpt2_word_encoder_forward.11} parent=0 // pred_check_branch
    %314 = sbr.rel (0) target = $region41
  $region40: #{gpt2_word_encoder_forward.11} parent=0 // pred_region
    _
  $region41: #{gpt2_word_encoder_forward.11} parent=0 // pred_fallthru
    _
  // Predicated region
  $region42: #{gpt2_word_encoder_forward.11} parent=0 // pred_check
    _
  $region43: #{gpt2_word_encoder_forward.11} parent=0 // pred_check_branch
    %316 = sbr.rel (0) target = $region45
  $region44: #{gpt2_word_encoder_forward.11} parent=0 // pred_region
    _
  $region45: #{gpt2_word_encoder_forward.11} parent=0 // pred_fallthru
    _
  // Predicated region
  $region46: #{gpt2_word_encoder_forward.11} parent=0 // pred_check
    _
  $region47: #{gpt2_word_encoder_forward.11} parent=0 // pred_check_branch
    %318 = sbr.rel (0) target = $region49
  $region48: #{gpt2_word_encoder_forward.11} parent=0 // pred_region
    _
  $region49: #{gpt2_word_encoder_forward.11} parent=0 // pred_fallthru
    _
  // Predicated region
  $region50: #{gpt2_word_encoder_forward.11} parent=0 // pred_check
    _
  $region51: #{gpt2_word_encoder_forward.11} parent=0 // pred_check_branch
    %320 = sbr.rel (0) target = $region53
  $region52: #{gpt2_word_encoder_forward.11} parent=0 // pred_region
    _
  $region53: #{gpt2_word_encoder_forward.11} parent=0 // pred_fallthru
    _
  // Predicated region
  $region54: #{gpt2_word_encoder_forward.11} parent=0 // pred_check
    _
  $region55: #{gpt2_word_encoder_forward.11} parent=0 // pred_check_branch
    %322 = sbr.rel (0) target = $region57
  $region56: #{gpt2_word_encoder_forward.11} parent=0 // pred_region
    _
  $region57: #{gpt2_word_encoder_forward.11} parent=0 // pred_fallthru
    _
  // Predicated region
  $region58: #{gpt2_word_encoder_forward.11} parent=0 // pred_check
    _
  $region59: #{gpt2_word_encoder_forward.11} parent=0 // pred_check_branch
    %324 = sbr.rel (0) target = $region61
  $region60: #{gpt2_word_encoder_forward.11} parent=0 // pred_region
    _
  $region61: #{gpt2_word_encoder_forward.11} parent=0 // pred_fallthru
    _

// kernel: gpt2_word_encoder_forward.15
$region0: #{gpt2_word_encoder_forward.15}
  #allocation0 [shape = 'u32[]', space=smem, size = 0x4, offset = 0x4, fixed_abs, tag = 'smem constant byte address 0x4 - core index']
  #allocation1 [shape = 'u32[144,128]{1,0:T(1,128)}', space=vmem, size = 0x12000, scoped, tag = 'internal scratch']
  %s0 = inlined_call_operand.vmem [shape: bf16[16,128], index: 0, kind: input, shape index: {}]
  %s1 = inlined_call_operand.vmem [shape: bf16[128,32], index: 1, kind: input, shape index: {}]
  %s2 = inlined_call_operand.vmem [shape: f32[1,32], index: 2, kind: input, shape index: {}]
  %s3 = inlined_call_operand.vmem [shape: bf16[16,32], index: 3, kind: input, shape index: {}]
  %s4 = inlined_call_operand.vmem [shape: bf16[16,32], index: 4, kind: output, shape index: {}]
  %s5 = sld [smem:[#allocation0]]
  $region26: #{gpt2_word_encoder_forward.15} parent=0
    _
  %s7 = ssub.s32 1, %s5
  %s8 = scalar_select 0, %s7, %s5
  // Predicated region
  $region2: #{gpt2_word_encoder_forward.15} parent=0 // pred_check
    _
  $region3: #{gpt2_word_encoder_forward.15} parent=0 // pred_check_branch
    %10 = sbr.rel (0) target = $region5
  $region4: #{gpt2_word_encoder_forward.15} parent=0 // pred_region
    _
  $region5: #{gpt2_word_encoder_forward.15} parent=0 // pred_fallthru
    _
  // Predicated region
  $region6: #{gpt2_word_encoder_forward.15} parent=0 // pred_check
    _
  $region7: #{gpt2_word_encoder_forward.15} parent=0 // pred_check_branch
    %12 = sbr.rel (0) target = $region9
  $region8: #{gpt2_word_encoder_forward.15} parent=0 // pred_region
    _
  $region9: #{gpt2_word_encoder_forward.15} parent=0 // pred_fallthru
    _
  // Predicated region
  $region10: #{gpt2_word_encoder_forward.15} parent=0 // pred_check
    _
  $region11: #{gpt2_word_encoder_forward.15} parent=0 // pred_check_branch
    %14 = sbr.rel (0) target = $region13
  $region12: #{gpt2_word_encoder_forward.15} parent=0 // pred_region
    _
  $region13: #{gpt2_word_encoder_forward.15} parent=0 // pred_fallthru
    _
  // Predicated region
  $region14: #{gpt2_word_encoder_forward.15} parent=0 // pred_check
    _
  $region15: #{gpt2_word_encoder_forward.15} parent=0 // pred_check_branch
    %16 = sbr.rel (0) target = $region17
  $region16: #{gpt2_word_encoder_forward.15} parent=0 // pred_region
    _
  $region17: #{gpt2_word_encoder_forward.15} parent=0 // pred_fallthru
    _
  %v18 = vld [vmem:[%s0] sm:$0xf]
  %v19 = vld [vmem:[%s0 + $0x4] sm:$0xf]
  %v20 = vld [vmem:[%s1] sm:$0xf]
  %v21 = vld [vmem:[%s1 + $0x4] sm:$0xf]
  %v22 = vld [vmem:[%s1 + $0x8] sm:$0xf]
  %v23 = vld [vmem:[%s1 + $0xc] sm:$0xf]
  %v24 = vld [vmem:[%s1 + $0x10] sm:$0xf]
  %v25 = vld [vmem:[%s1 + $0x14] sm:$0xf]
  %v26 = vld [vmem:[%s1 + $0x18] sm:$0xf]
  %v27 = vld [vmem:[%s1 + $0x1c] sm:$0xf]
  %v28 = vld [vmem:[%s1 + $0x20] sm:$0xf]
  %v29 = vld [vmem:[%s1 + $0x24] sm:$0xf]
  %v30 = vld [vmem:[%s1 + $0x28] sm:$0xf]
  %v31 = vld [vmem:[%s1 + $0x2c] sm:$0xf]
  %v32 = vld [vmem:[%s1 + $0x30] sm:$0xf]
  %v33 = vld [vmem:[%s1 + $0x34] sm:$0xf]
  %v34 = vld [vmem:[%s1 + $0x38] sm:$0xf]
  %v35 = vld [vmem:[%s1 + $0x3c] sm:$0xf]
  %v36 = vld [vmem:[%s2] sm:$0x1]
  %v38 = vlaneseq
  %v39 = vshrl.u32 %v38, 7
  %v40 = vsub.s32 0, %v39
  %v41 = vrot.slane %v36, %v40
  %v45 = vunpack.c.l.b16 %v18
  %v46 = vunpack.c.l.b16 %v19
  %v47 = vpack.c.b16 %v46, %v45
  %v65 = vunpack.c.l.b16 %v20
  %v66 = vunpack.c.l.b16 %v21
  %v67 = vunpack.c.l.b16 %v22
  %v68 = vunpack.c.l.b16 %v23
  %v69 = vunpack.c.l.b16 %v24
  %v70 = vunpack.c.l.b16 %v25
  %v71 = vunpack.c.l.b16 %v26
  %v72 = vunpack.c.l.b16 %v27
  %v73 = vunpack.c.l.b16 %v28
  %v74 = vunpack.c.l.b16 %v29
  %v75 = vunpack.c.l.b16 %v30
  %v76 = vunpack.c.l.b16 %v31
  %v77 = vunpack.c.l.b16 %v32
  %v78 = vunpack.c.l.b16 %v33
  %v79 = vunpack.c.l.b16 %v34
  %v80 = vunpack.c.l.b16 %v35
  %v81 = vpack.c.b16 %v66, %v65
  %v82 = vpack.c.b16 %v68, %v67
  %v83 = vpack.c.b16 %v70, %v69
  %v84 = vpack.c.b16 %v72, %v71
  %v85 = vpack.c.b16 %v74, %v73
  %v86 = vpack.c.b16 %v76, %v75
  %v87 = vpack.c.b16 %v78, %v77
  %v88 = vpack.c.b16 %v80, %v79
  %97 = vmatprep.subr.bf16.mxu0 0
  %98 = vmatpush1.bf16.msra.mxu0 %v81
  %99 = vmatprep.subr.bf16.mxu0 0
  %100 = vmatpush1.bf16.msra.mxu0 %v82
  %101 = vmatprep.subr.bf16.mxu0 0
  %102 = vmatpush1.bf16.msra.mxu0 %v83
  %103 = vmatprep.subr.bf16.mxu0 0
  %104 = vmatpush1.bf16.msra.mxu0 %v84
  %105 = vmatprep.subr.bf16.mxu0 0
  %106 = vmatpush1.bf16.msra.mxu0 %v85
  %107 = vmatprep.subr.bf16.mxu0 0
  %108 = vmatpush1.bf16.msra.mxu0 %v86
  %109 = vmatprep.subr.bf16.mxu0 0
  %110 = vmatpush1.bf16.msra.mxu0 %v87
  %111 = vmatprep.subr.bf16.mxu0 0
  %112 = vmatpush1.bf16.msra.mxu0 %v88
  %113 = vmatprep.subr.bf16.mxu0 0
  %114 = vmatpush1.bf16.msra.mxu0 0
  %115 = vmatprep.subr.bf16.mxu0 0
  %116 = vmatpush1.bf16.msra.mxu0 0
  %117 = vmatprep.subr.bf16.mxu0 0
  %118 = vmatpush1.bf16.msra.mxu0 0
  %119 = vmatprep.subr.bf16.mxu0 0
  %120 = vmatpush1.bf16.msra.mxu0 0
  %121 = vmatprep.subr.bf16.mxu0 0
  %122 = vmatpush1.bf16.msra.mxu0 0
  %123 = vmatprep.subr.bf16.mxu0 0
  %124 = vmatpush1.bf16.msra.mxu0 0
  %125 = vmatprep.subr.bf16.mxu0 0
  %126 = vmatpush1.bf16.msra.mxu0 0
  %127 = vmatprep.subr.bf16.mxu0 0
  %128 = vmatpush1.bf16.msra.mxu0 0
  %129 = vmatprep.mubr.bf16.mxu0 0
  %130 = vmatmul.mubr.bf16.gmra.mrb[0].mxu0 %v47
  %v131 = vpop.f32.mrb[0].mxu0
  %v132 = vadd.f32 %v41, %v131
  %v133 = vpop.f32.mrb[0].mxu0
  %v134 = vpop.f32.mrb[0].mxu0
  %v135 = vadd.f32 %v41, %v134
  %v136 = vpop.f32.mrb[0].mxu0
  %137 = vdwg.mxu0
  %v138 = vld [vmem:[%s3] sm:$0xf]
  %v139 = vld [vmem:[%s3 + $0x4] sm:$0xf]
  %v140 = vunpack.c.l.bf16 %v138
  %v141 = vunpack.c.l.bf16 %v139
  %v142 = vadd.f32 %v132, %v140
  %v143 = vadd.f32 %v135, %v141
  %v144 = vpack.c.bf16 %v143, %v142
  %v146 = vunpack.c.l.b16 %v144
  %v147 = vunpack.c.h.b16 %v144
  %v148 = vpack.c.b16 %v146, %v146
  %v149 = vpack.c.b16 %v147, %v147
  %vm152 = vcmask 257024
  %153 = vst.msk [vmem:[%s4] sm:$0xf] %vm152, %v148
  %154 = vst.msk [vmem:[%s4 + $0x4] sm:$0xf] %vm152, %v149
  // Predicated region
  $region18: #{gpt2_word_encoder_forward.15} parent=0 // pred_check
    _
  $region19: #{gpt2_word_encoder_forward.15} parent=0 // pred_check_branch
    %156 = sbr.rel (0) target = $region21
  $region20: #{gpt2_word_encoder_forward.15} parent=0 // pred_region
    _
  $region21: #{gpt2_word_encoder_forward.15} parent=0 // pred_fallthru
    _
  // Predicated region
  $region22: #{gpt2_word_encoder_forward.15} parent=0 // pred_check
    _
  $region23: #{gpt2_word_encoder_forward.15} parent=0 // pred_check_branch
    %158 = sbr.rel (0) target = $region25
  $region24: #{gpt2_word_encoder_forward.15} parent=0 // pred_region
    _
  $region25: #{gpt2_word_encoder_forward.15} parent=0 // pred_fallthru
    _

// kernel: gpt2_word_encoder_forward.21
$region0: #{gpt2_word_encoder_forward.21}
  #allocation0 [shape = 'u32[]', space=smem, size = 0x4, offset = 0x4, fixed_abs, tag = 'smem constant byte address 0x4 - core index']
  #allocation1 [shape = 'u32[144,128]{1,0:T(1,128)}', space=vmem, size = 0x12000, scoped, tag = 'internal scratch']
  %s0 = inlined_call_operand.vmem [shape: bf16[16,32], index: 0, kind: input, shape index: {}]
  %s1 = inlined_call_operand.vmem [shape: f32[1,32], index: 1, kind: input, shape index: {}]
  %s2 = inlined_call_operand.vmem [shape: f32[1,32], index: 2, kind: input, shape index: {}]
  %s3 = inlined_call_operand.hbm [shape: f32[16,32], index: 3, kind: output, shape index: {}]
  %s4 = sld [smem:[#allocation0]]
  $region22: #{gpt2_word_encoder_forward.21} parent=0
    _
  %s6 = ssub.s32 1, %s4
  %s7 = scalar_select 0, %s6, %s4
  $region1: #{gpt2_word_encoder_forward.21} parent=0
    #allocation2 [shape = 'u8[8192]{0}', space=vmem, size = 0x2000, scoped, tag = 'output window, operand 0, single buffered']
    #allocation3 [shape = 's32[1]{0}', space=sflag, size = 0x4, scoped, tag = 'scoped memory for gpt2_word_encoder_forward.21']
    %8 = vsyncpa [#allocation3], 0
    // Predicated region
    $region2: #{gpt2_word_encoder_forward.21} parent=1 // pred_check
      _
    $region3: #{gpt2_word_encoder_forward.21} parent=1 // pred_check_branch
      %10 = sbr.rel (0) target = $region5
    $region4: #{gpt2_word_encoder_forward.21} parent=1 // pred_region
      _
    $region5: #{gpt2_word_encoder_forward.21} parent=1 // pred_fallthru
      _
    // Predicated region
    $region6: #{gpt2_word_encoder_forward.21} parent=1 // pred_check
      _
    $region7: #{gpt2_word_encoder_forward.21} parent=1 // pred_check_branch
      %12 = sbr.rel (0) target = $region9
    $region8: #{gpt2_word_encoder_forward.21} parent=1 // pred_region
      _
    $region9: #{gpt2_word_encoder_forward.21} parent=1 // pred_fallthru
      _
    // Predicated region
    $region10: #{gpt2_word_encoder_forward.21} parent=1 // pred_check
      _
    $region11: #{gpt2_word_encoder_forward.21} parent=1 // pred_check_branch
      %14 = sbr.rel (0) target = $region13
    $region12: #{gpt2_word_encoder_forward.21} parent=1 // pred_region
      _
    $region13: #{gpt2_word_encoder_forward.21} parent=1 // pred_fallthru
      _
    %v15 = vld [vmem:[%s0] sm:$0xf]
    %v16 = vld [vmem:[%s0 + $0x4] sm:$0xf]
    %v17 = vunpack.c.l.bf16 %v15
    %v18 = vunpack.c.l.bf16 %v16
    %v19 = vld [vmem:[%s1] sm:$0x1]
    %v20 = vld [vmem:[%s2] sm:$0x1]
    %vm21 = vcmask 261120
    %v22 = vsel %vm21, %v17, 0.0
    %23 = vadd.xlane.f32.xlu0 %v22
    %v24 = vpop.xlane.xlu0 %23
    %v25 = vsel %vm21, %v18, 0.0
    %26 = vadd.xlane.f32.xlu0 %v25
    %v27 = vpop.xlane.xlu0 %26
    %v28 = vrcp.pop 32.0
    %v29 = vmul.f32 %v24, %v28
    %v30 = vmul.f32 %v27, %v28
    %v31 = vsub.f32 %v17, %v29
    %v32 = vsub.f32 %v18, %v30
    %v33 = vmul.f32 %v31, %v31
    %v34 = vmul.f32 %v32, %v32
    %v35 = vsel %vm21, %v33, 0.0
    %36 = vadd.xlane.f32.xlu0 %v35
    %v37 = vpop.xlane.xlu0 %36
    %v38 = vsel %vm21, %v34, 0.0
    %39 = vadd.xlane.f32.xlu0 %v38
    %v40 = vpop.xlane.xlu0 %39
    %v41 = vmul.f32 %v37, %v28
    %v42 = vmul.f32 %v40, %v28
    %v43 = vadd.f32 %v41, 1e-05
    %v44 = vadd.f32 %v42, 1e-05
    %v45 = vrsqrt.pop %v43
    %v46 = vrsqrt.pop %v44
    %v47 = vmul.f32 %v31, %v45
    %v48 = vmul.f32 %v32, %v46
    %v50 = vlaneseq
    %v51 = vshrl.u32 %v50, 7
    %v52 = vsub.s32 0, %v51
    %v53 = vrot.slane %v19, %v52
    %v55 = vmul.f32 %v47, %v53
    %v56 = vmul.f32 %v48, %v53
    %v58 = vlaneseq
    %v59 = vshrl.u32 %v58, 7
    %v60 = vsub.s32 0, %v59
    %v61 = vrot.slane %v20, %v60
    %v63 = vadd.f32 %v55, %v61
    %v64 = vadd.f32 %v56, %v61
    %65 = vst.msk [vmem:[#allocation2] sm:$0xff] %vm21, %v63
    %66 = vst.msk [vmem:[#allocation2 + $0x8] sm:$0xff] %vm21, %v64
    // Predicated region
    $region14: #{gpt2_word_encoder_forward.21} parent=1 // pred_check
      _
    $region15: #{gpt2_word_encoder_forward.21} parent=1 // pred_check_branch
      %68 = sbr.rel (0) target = $region17
    $region16: #{gpt2_word_encoder_forward.21} parent=1 // pred_region
      %s70 = ssub.s32 256, 256
      %71 = vsyncadd [#allocation3], %s70
      %s72 = sshll.u32 [#allocation2], 4
      %s73 = int_to_ptr.vmem [resolvable:$true] %s72
      %78 = dma.vmem_to_hbm [thread:$0]  %s73, 256, %s3, [#allocation3], 128, 128, 8
    $region17: #{gpt2_word_encoder_forward.21} parent=1 // pred_fallthru
      _
    // Predicated region
    $region18: #{gpt2_word_encoder_forward.21} parent=1 // pred_check
      _
    $region19: #{gpt2_word_encoder_forward.21} parent=1 // pred_check_branch
      %80 = sbr.rel (0) target = $region21
    $region20: #{gpt2_word_encoder_forward.21} parent=1 // pred_region
      %81 = dma.done [#allocation3], 256
    $region21: #{gpt2_word_encoder_forward.21} parent=1 // pred_fallthru
      _
    %82 = vsyncpa [#allocation3], 1

</llo_original>
